<compile_context>
chip_gen: v7x
topology: tpu7x:2x2x1
jax: 0.10.0
libtpu: 0.0.40
codegen_flags: <defaults>
</compile_context>

<pallas_src>
import functools
import math

import jax
import jax.numpy as jnp
from jax.experimental import pallas as pl
from jax.experimental.pallas import tpu as pltpu


def _ffn_kernel(x_ref, w1_ref, b1_ref, w2_ref, b2_ref, o_ref):
    """One row tile of o = GELU(x @ w1 + b1) @ w2 + b2.

    x_ref:  (tm, dim)      native dtype (f32 or bf16), fed straight to the MXU
    w1_ref: (dim, hidden)  resident across the grid (constant index_map)
    b1_ref: (1, hidden)
    w2_ref: (hidden, dim)  resident across the grid
    b2_ref: (1, dim)
    o_ref:  (tm, dim)
    """
    # Matmul in the operands' native dtype with f32 accumulation (native MXU
    # path).  No explicit upcast of the resident weights: that would burn VPU
    # slots every grid step and double the operand VMEM/vreg footprint.
    h = jnp.dot(x_ref[...], w1_ref[...], preferred_element_type=jnp.float32)
    h = h + b1_ref[...].astype(jnp.float32)

    # Exact (erf-based) GELU in f32, matching torch.nn.GELU() default.
    h = 0.5 * h * (1.0 + jax.lax.erf(h * (1.0 / math.sqrt(2.0))))

    # Dropout with p=0.0 is the identity.
    # TODO(synk): training-mode dropout (p>0) would need pltpu.prng_seed /
    #             pltpu.prng_random_bits masking.

    out = jnp.dot(h.astype(w2_ref.dtype), w2_ref[...],
                  preferred_element_type=jnp.float32)
    out = out + b2_ref[...].astype(jnp.float32)
    o_ref[...] = out.astype(o_ref.dtype)


@functools.partial(jax.jit, static_argnames=("tm",))
def feed_forward(x, w1, b1, w2, b2, *, tm=256):
    """x: (batch, seq, dim). w1: (dim, hidden), b1: (hidden,),
    w2: (hidden, dim), b2: (dim,). Returns (batch, seq, dim)."""
    batch, seq, dim = x.shape
    hidden = w1.shape[1]
    assert tm % 8 == 0, "row tile must be sublane-aligned (multiple of 8)"

    M = batch * seq
    # cdiv grid + wrapper-side zero padding instead of requiring M % tm == 0,
    # so the MXU-optimal tile can be used for any (batch, seq).
    n_tiles = pl.cdiv(M, tm)
    Mp = n_tiles * tm

    x2 = x.reshape(M, dim)
    if Mp != M:
        x2 = jnp.pad(x2, ((0, Mp - M), (0, 0)))
    b1_2 = b1.reshape(1, hidden)
    b2_2 = b2.reshape(1, dim)

    # Note on lane density: for transformer-sized FFNs dim/hidden >= 128, so x,
    # intermediate and output blocks are all lane-dense (last dim a multiple of
    # 128) and stores lower to full-width vst.  For very large dim*hidden where
    # both weights cannot stay resident (esp. v7x's 64 MiB VMEM), add a second
    # "arbitrary" grid axis over hidden with a VMEM accumulator; single-buffer
    # the constant-index weight specs to halve their residency.
    out2 = pl.pallas_call(
        _ffn_kernel,
        out_shape=jax.ShapeDtypeStruct((Mp, dim), x.dtype),
        grid_spec=pltpu.PrefetchScalarGridSpec(
            num_scalar_prefetch=0,
            grid=(n_tiles,),
            in_specs=[
                pl.BlockSpec((tm, dim), lambda i: (i, 0)),      # x tile
                pl.BlockSpec((dim, hidden), lambda i: (0, 0)),  # w1 (resident)
                pl.BlockSpec((1, hidden), lambda i: (0, 0)),    # b1
                pl.BlockSpec((hidden, dim), lambda i: (0, 0)),  # w2 (resident)
                pl.BlockSpec((1, dim), lambda i: (0, 0)),       # b2
            ],
            out_specs=pl.BlockSpec((tm, dim), lambda i: (i, 0)),
        ),
        compiler_params=pltpu.CompilerParams(
            dimension_semantics=("parallel",),   # shard row tiles across TCs
            # Explicit VMEM budget; 64 MiB fits every generation (v7x has
            # 64 MiB/TC) and is above the 16/32 MiB scoped defaults, allowing
            # large VMEM-filling row tiles on v5e/v6e.
            vmem_limit_bytes=64 * 1024 * 1024,
        ),
    )(x2, w1, b1_2, w2, b2_2)

    if Mp != M:
        out2 = out2[:M]
    return out2.reshape(batch, seq, dim)


def _reference(x, w1, b1, w2, b2):
    hp = jax.lax.Precision.HIGHEST
    h = jnp.einsum("bsd,dh->bsh", x, w1, precision=hp) + b1
    h = 0.5 * h * (1.0 + jax.lax.erf(h / jnp.sqrt(2.0).astype(h.dtype)))
    return jnp.einsum("bsh,hd->bsd", h, w2, precision=hp) + b2


if __name__ == "__main__":
    # Small but MXU/lane-aligned shapes: dim=128, ff_mul=4 -> hidden=512.
    # batch*seq = 1024 -> grid of 4 row tiles at tm=256 (keeps both v7x TCs busy).
    batch, seq, dim, ff_mul = 4, 256, 128, 4
    hidden = dim * ff_mul

    key = jax.random.PRNGKey(0)
    kx, kw1, kb1, kw2, kb2 = jax.random.split(key, 5)

    x = jax.random.normal(kx, (batch, seq, dim), dtype=jnp.float32)

    # Deterministic init mimicking nn.Linear's uniform(-1/sqrt(fan_in), 1/sqrt(fan_in)).
    lim1 = 1.0 / math.sqrt(dim)
    lim2 = 1.0 / math.sqrt(hidden)
    w1 = jax.random.uniform(kw1, (dim, hidden), jnp.float32, -lim1, lim1)
    b1 = jax.random.uniform(kb1, (hidden,), jnp.float32, -lim1, lim1)
    w2 = jax.random.uniform(kw2, (hidden, dim), jnp.float32, -lim2, lim2)
    b2 = jax.random.uniform(kb2, (dim,), jnp.float32, -lim2, lim2)

    out = feed_forward(x, w1, b1, w2, b2, tm=256)
    out = jax.block_until_ready(out)

    ref = _reference(x, w1, b1, w2, b2)
    assert out.shape == (batch, seq, dim)
    err = jnp.max(jnp.abs(out - ref))
    assert jnp.allclose(out, ref, atol=1e-3, rtol=1e-3), f"mismatch vs reference (max abs err {err})"

    print("KERNEL_OK")
</pallas_src>

<mosaic_0001>
module attributes {stable_mosaic.version = 11 : i64} {
  func.func @_ffn_kernel(%arg0: i32, %arg1: memref<256x128xf32, #tpu.memory_space<vmem>>, %arg2: memref<128x512xf32, #tpu.memory_space<vmem>>, %arg3: memref<1x512xf32, #tpu.memory_space<vmem>>, %arg4: memref<512x128xf32, #tpu.memory_space<vmem>>, %arg5: memref<1x128xf32, #tpu.memory_space<vmem>>, %arg6: memref<256x128xf32, #tpu.memory_space<vmem>>) attributes {dimension_semantics = [#tpu.dimension_semantics<parallel>], iteration_bounds = array<i64: 4>, scalar_prefetch = 0 : i64, scratch_operands = 0 : i64, tpu.core_type = #tpu.core_type<tc>, window_params = [{transform_indices = @transform_0, window_bounds = array<i64: 256, 128>}, {pipeline_mode = #tpu.pipeline_mode<synchronous>, transform_indices = @transform_1, window_bounds = array<i64: 128, 512>}, {pipeline_mode = #tpu.pipeline_mode<synchronous>, transform_indices = @transform_2, window_bounds = array<i64: 1, 512>}, {pipeline_mode = #tpu.pipeline_mode<synchronous>, transform_indices = @transform_3, window_bounds = array<i64: 512, 128>}, {pipeline_mode = #tpu.pipeline_mode<synchronous>, transform_indices = @transform_4, window_bounds = array<i64: 1, 128>}, {transform_indices = @transform_5, window_bounds = array<i64: 256, 128>}]} {
    %c0 = arith.constant 0 : index
    %c0_0 = arith.constant 0 : index
    %0 = vector.load %arg1[%c0, %c0_0] : memref<256x128xf32, #tpu.memory_space<vmem>>, vector<256x128xf32>
    %c0_1 = arith.constant 0 : index
    %c0_2 = arith.constant 0 : index
    %1 = vector.load %arg2[%c0_1, %c0_2] : memref<128x512xf32, #tpu.memory_space<vmem>>, vector<128x512xf32>
    %cst = arith.constant dense<0.000000e+00> : vector<256x512xf32>
    %2 = tpu.matmul %0, %1, %cst {dimension_numbers = #tpu.dot_dimension_numbers<[1], [0], [0], [1], [0, 0, 1, 1], [], []>} : vector<256x128xf32>, vector<128x512xf32>, vector<256x512xf32> -> vector<256x512xf32>
    %c0_3 = arith.constant 0 : index
    %c0_4 = arith.constant 0 : index
    %3 = vector.load %arg3[%c0_3, %c0_4] : memref<1x512xf32, #tpu.memory_space<vmem>>, vector<1x512xf32>
    %4 = vector.broadcast %3 : vector<1x512xf32> to vector<256x512xf32>
    %5 = arith.addf %2, %4 : vector<256x512xf32>
    %cst_5 = arith.constant 5.000000e-01 : f32
    %6 = vector.broadcast %cst_5 : f32 to vector<256x512xf32>
    %7 = arith.mulf %6, %5 : vector<256x512xf32>
    %cst_6 = arith.constant 0.707106769 : f32
    %8 = vector.broadcast %cst_6 : f32 to vector<256x512xf32>
    %9 = arith.mulf %5, %8 : vector<256x512xf32>
    %10 = math.erf %9 : vector<256x512xf32>
    %cst_7 = arith.constant 1.000000e+00 : f32
    %11 = vector.broadcast %cst_7 : f32 to vector<256x512xf32>
    %12 = arith.addf %11, %10 : vector<256x512xf32>
    %13 = arith.mulf %7, %12 : vector<256x512xf32>
    %c0_8 = arith.constant 0 : index
    %c0_9 = arith.constant 0 : index
    %14 = vector.load %arg4[%c0_8, %c0_9] : memref<512x128xf32, #tpu.memory_space<vmem>>, vector<512x128xf32>
    %cst_10 = arith.constant dense<0.000000e+00> : vector<256x128xf32>
    %15 = tpu.matmul %13, %14, %cst_10 {dimension_numbers = #tpu.dot_dimension_numbers<[1], [0], [0], [1], [0, 0, 1, 1], [], []>} : vector<256x512xf32>, vector<512x128xf32>, vector<256x128xf32> -> vector<256x128xf32>
    %c0_11 = arith.constant 0 : index
    %c0_12 = arith.constant 0 : index
    %16 = vector.load %arg5[%c0_11, %c0_12] : memref<1x128xf32, #tpu.memory_space<vmem>>, vector<1x128xf32>
    %17 = vector.broadcast %16 : vector<1x128xf32> to vector<256x128xf32>
    %18 = arith.addf %15, %17 : vector<256x128xf32>
    %c0_13 = arith.constant 0 : index
    %c0_14 = arith.constant 0 : index
    %19 = vector.load %arg6[%c0_13, %c0_14] : memref<256x128xf32, #tpu.memory_space<vmem>>, vector<256x128xf32>
    tpu.vector_store %arg6[%c0_13, %c0_14], %18 {strides = array<i32>} : memref<256x128xf32, #tpu.memory_space<vmem>>, vector<256x128xf32>,
    return
  }
  func.func @transform_0(%arg0: i32) -> (i32, i32) {
    %c0_i32 = arith.constant 0 : i32
    %c0_i32_0 = arith.constant 0 : i32
    return %arg0, %c0_i32 : i32, i32
  }
  func.func @transform_1(%arg0: i32) -> (i32, i32) {
    %c0_i32 = arith.constant 0 : i32
    %c0_i32_0 = arith.constant 0 : i32
    %c0_i32_1 = arith.constant 0 : i32
    return %c0_i32, %c0_i32_0 : i32, i32
  }
  func.func @transform_2(%arg0: i32) -> (i32, i32) {
    %c0_i32 = arith.constant 0 : i32
    %c0_i32_0 = arith.constant 0 : i32
    %c0_i32_1 = arith.constant 0 : i32
    return %c0_i32, %c0_i32_0 : i32, i32
  }
  func.func @transform_3(%arg0: i32) -> (i32, i32) {
    %c0_i32 = arith.constant 0 : i32
    %c0_i32_0 = arith.constant 0 : i32
    %c0_i32_1 = arith.constant 0 : i32
    return %c0_i32, %c0_i32_0 : i32, i32
  }
  func.func @transform_4(%arg0: i32) -> (i32, i32) {
    %c0_i32 = arith.constant 0 : i32
    %c0_i32_0 = arith.constant 0 : i32
    %c0_i32_1 = arith.constant 0 : i32
    return %c0_i32, %c0_i32_0 : i32, i32
  }
  func.func @transform_5(%arg0: i32) -> (i32, i32) {
    %c0_i32 = arith.constant 0 : i32
    %c0_i32_0 = arith.constant 0 : i32
    return %arg0, %c0_i32 : i32, i32
  }
}

</mosaic_0001>

<llo_original>
// kernel: feed_forward.1
$region0: #{feed_forward.1}
  #allocation0 [shape = 'u32[]', space=smem, size = 0x4, offset = 0x4, fixed_abs, tag = 'smem constant byte address 0x4 - core index']
  #allocation1 [shape = 'u32[144,128]{1,0:T(1,128)}', space=vmem, size = 0x12000, scoped, tag = 'internal scratch']
  %s0 = inlined_call_operand.hbm [shape: f32[1024,128], index: 0, kind: input, shape index: {}]
  %s1 = inlined_call_operand.hbm [shape: f32[128,512], index: 1, kind: input, shape index: {}]
  %s2 = inlined_call_operand.hbm [shape: f32[1,512], index: 2, kind: input, shape index: {}]
  %s3 = inlined_call_operand.hbm [shape: f32[512,128], index: 3, kind: input, shape index: {}]
  %s4 = inlined_call_operand.hbm [shape: f32[1,128], index: 4, kind: input, shape index: {}]
  %s5 = inlined_call_operand.hbm [shape: f32[1024,128], index: 5, kind: output, shape index: {}]
  %s6 = sld [smem:[#allocation0]]
  $region73: #{feed_forward.1} parent=0
    _
  %s8 = ssub.s32 1, %s6
  %s9 = scalar_select 0, %s8, %s6
  $region1: #{feed_forward.1} parent=0
    #allocation2 [shape = 'u8[262144]{0}', space=vmem, size = 0x40000, scoped, tag = 'input window, operand 0']
    #allocation3 [shape = 's32[2]{0}', space=sflag, size = 0x8, scoped, tag = 'scoped memory for feed_forward.1']
    #allocation4 [shape = 's32[2]{0}', space=sflag, size = 0x8, scoped, tag = 'scoped memory for feed_forward.1']
    #allocation5 [shape = 'u8[262144]{0}', space=vmem, size = 0x40000, scoped, tag = 'input window, operand 1, single buffered']
    #allocation6 [shape = 's32[1]{0}', space=sflag, size = 0x4, scoped, tag = 'scoped memory for feed_forward.1']
    #allocation7 [shape = 'u8[2048]{0}', space=vmem, size = 0x800, scoped, tag = 'input window, operand 2, single buffered']
    #allocation8 [shape = 'u8[262144]{0}', space=vmem, size = 0x40000, scoped, tag = 'input window, operand 3, single buffered']
    #allocation9 [shape = 's32[1]{0}', space=sflag, size = 0x4, scoped, tag = 'scoped memory for feed_forward.1']
    #allocation10 [shape = 'u8[512]{0}', space=vmem, size = 0x400, scoped, tag = 'input window, operand 4, single buffered']
    #allocation11 [shape = 'u8[262144]{0}', space=vmem, size = 0x40000, scoped, tag = 'output window, operand 0']
    %10 = vsyncpa [#allocation3], 0
    %s11 = scalar_lea.sflag [#allocation3], 1
    %12 = vsyncpa %s11, 0
    %13 = vsyncpa [#allocation6], 0
    %14 = vsyncpa [#allocation9], 0
    %15 = vsyncpa [#allocation4], 0
    %s16 = scalar_lea.sflag [#allocation4], 1
    %17 = vsyncpa %s16, 0
    loop: start=0, step=1, limit=6
    $region2: #{feed_forward.1} parent=1 // loop_pre_header
      _
    $region3: #{feed_forward.1} parent=1 // loop_header
      %s19 = sphi 0, %s23
      %p20 = scmp.ge.s32.totalorder %s19, 6
      %s29 = sphi 0, %s31
      %s32 = sphi 0, %s29
      %s33 = sphi 0, %s32
      %s49 = sphi 0, %s33
      %s53 = sphi 0, %s53
      %s55 = sphi 0, %s53
      %s56 = sphi 0, %s55
      %s70 = sphi 0, %s56
      %s74 = sphi 0, %s74
      %s76 = sphi 0, %s74
      %s77 = sphi 0, %s76
      %s91 = sphi 0, %s77
      %s95 = sphi 0, %s95
      %s97 = sphi 0, %s95
      %s98 = sphi 0, %s97
      %s112 = sphi 0, %s98
      %s116 = sphi 0, %s116
      %s118 = sphi 0, %s116
      %s119 = sphi 0, %s118
      %s133 = sphi 0, %s119
      %s139 = sphi 0, %s141
      %s142 = sphi 0, %s139
      %s143 = sphi 0, %s142
      %s159 = sphi 0, %s143
    $region4: #{feed_forward.1} parent=1 // loop_header_branch
      %22 = sbr.rel (%p20) target = $region8
    $region5: #{feed_forward.1} parent=1 // loop_body
      %s24 = ssub.s32 %s19, 1
      %s25 = ssub.s32 %s19, 2
      %s26 = sadd.s32 %s19, 1
      %s27 = ssub.s32 %s19, %s26
      %p28 = scmp.eq.s32.totalorder %s27, 0
      %s30 = sadd.s32 %s29, 1
      %s31 = scalar_select %p28, %s29, %s30
      %p34 = pneg %p28
      %p35 = scmp.eq.s32.totalorder %s19, 3
      %p36 = por %p34, %p35
      %p37 = scmp.ne.s32.totalorder %s29, %s32
      %p38 = scmp.eq.s32.totalorder %s19, 0
      %p39 = por %p37, %p38
      %p40 = scmp.ne.s32.totalorder %s29, %s32
      %p41 = scmp.eq.s32.totalorder %s24, 3
      %p42 = por %p40, %p41
      %p43 = scmp.ne.s32.totalorder %s32, %s33
      %p44 = scmp.eq.s32.totalorder %s24, 0
      %p45 = por %p43, %p44
      %p46 = scmp.ne.s32.totalorder %s32, %s33
      %p47 = scmp.eq.s32.totalorder %s25, 3
      %p48 = por %p46, %p47
      %p50 = scmp.ne.s32.totalorder %s33, %s49
      %p51 = scmp.eq.s32.totalorder %s25, 0
      %p52 = por %p50, %p51
      %s54 = sadd.s32 %s53, 1
      %p57 = scmp.eq.s32.totalorder %s19, 3
      %p58 = scmp.ne.s32.totalorder %s53, %s55
      %p59 = scmp.eq.s32.totalorder %s19, 0
      %p60 = por %p58, %p59
      %p61 = scmp.ne.s32.totalorder %s53, %s55
      %p62 = scmp.eq.s32.totalorder %s24, 3
      %p63 = por %p61, %p62
      %p64 = scmp.ne.s32.totalorder %s55, %s56
      %p65 = scmp.eq.s32.totalorder %s24, 0
      %p66 = por %p64, %p65
      %p67 = scmp.ne.s32.totalorder %s55, %s56
      %p68 = scmp.eq.s32.totalorder %s25, 3
      %p69 = por %p67, %p68
      %p71 = scmp.ne.s32.totalorder %s56, %s70
      %p72 = scmp.eq.s32.totalorder %s25, 0
      %p73 = por %p71, %p72
      %s75 = sadd.s32 %s74, 1
      %p78 = scmp.eq.s32.totalorder %s19, 3
      %p79 = scmp.ne.s32.totalorder %s74, %s76
      %p80 = scmp.eq.s32.totalorder %s19, 0
      %p81 = por %p79, %p80
      %p82 = scmp.ne.s32.totalorder %s74, %s76
      %p83 = scmp.eq.s32.totalorder %s24, 3
      %p84 = por %p82, %p83
      %p85 = scmp.ne.s32.totalorder %s76, %s77
      %p86 = scmp.eq.s32.totalorder %s24, 0
      %p87 = por %p85, %p86
      %p88 = scmp.ne.s32.totalorder %s76, %s77
      %p89 = scmp.eq.s32.totalorder %s25, 3
      %p90 = por %p88, %p89
      %p92 = scmp.ne.s32.totalorder %s77, %s91
      %p93 = scmp.eq.s32.totalorder %s25, 0
      %p94 = por %p92, %p93
      %s96 = sadd.s32 %s95, 1
      %p99 = scmp.eq.s32.totalorder %s19, 3
      %p100 = scmp.ne.s32.totalorder %s95, %s97
      %p101 = scmp.eq.s32.totalorder %s19, 0
      %p102 = por %p100, %p101
      %p103 = scmp.ne.s32.totalorder %s95, %s97
      %p104 = scmp.eq.s32.totalorder %s24, 3
      %p105 = por %p103, %p104
      %p106 = scmp.ne.s32.totalorder %s97, %s98
      %p107 = scmp.eq.s32.totalorder %s24, 0
      %p108 = por %p106, %p107
      %p109 = scmp.ne.s32.totalorder %s97, %s98
      %p110 = scmp.eq.s32.totalorder %s25, 3
      %p111 = por %p109, %p110
      %p113 = scmp.ne.s32.totalorder %s98, %s112
      %p114 = scmp.eq.s32.totalorder %s25, 0
      %p115 = por %p113, %p114
      %s117 = sadd.s32 %s116, 1
      %p120 = scmp.eq.s32.totalorder %s19, 3
      %p121 = scmp.ne.s32.totalorder %s116, %s118
      %p122 = scmp.eq.s32.totalorder %s19, 0
      %p123 = por %p121, %p122
      %p124 = scmp.ne.s32.totalorder %s116, %s118
      %p125 = scmp.eq.s32.totalorder %s24, 3
      %p126 = por %p124, %p125
      %p127 = scmp.ne.s32.totalorder %s118, %s119
      %p128 = scmp.eq.s32.totalorder %s24, 0
      %p129 = por %p127, %p128
      %p130 = scmp.ne.s32.totalorder %s118, %s119
      %p131 = scmp.eq.s32.totalorder %s25, 3
      %p132 = por %p130, %p131
      %p134 = scmp.ne.s32.totalorder %s119, %s133
      %p135 = scmp.eq.s32.totalorder %s25, 0
      %p136 = por %p134, %p135
      %s137 = ssub.s32 %s19, %s26
      %p138 = scmp.eq.s32.totalorder %s137, 0
      %s140 = sadd.s32 %s139, 1
      %s141 = scalar_select %p138, %s139, %s140
      %p144 = pneg %p138
      %p145 = scmp.eq.s32.totalorder %s19, 3
      %p146 = por %p144, %p145
      %p147 = scmp.ne.s32.totalorder %s139, %s142
      %p148 = scmp.eq.s32.totalorder %s19, 0
      %p149 = por %p147, %p148
      %p150 = scmp.ne.s32.totalorder %s139, %s142
      %p151 = scmp.eq.s32.totalorder %s24, 3
      %p152 = por %p150, %p151
      %p153 = scmp.ne.s32.totalorder %s142, %s143
      %p154 = scmp.eq.s32.totalorder %s24, 0
      %p155 = por %p153, %p154
      %p156 = scmp.ne.s32.totalorder %s142, %s143
      %p157 = scmp.eq.s32.totalorder %s25, 3
      %p158 = por %p156, %p157
      %p160 = scmp.ne.s32.totalorder %s143, %s159
      %p161 = scmp.eq.s32.totalorder %s25, 0
      %p162 = por %p160, %p161
      %p163 = scmp.le.s32.totalorder 1, %s19
      %p164 = scmp.lt.s32.totalorder %s19, 5
      %p165 = pnand %p163, %p164
      %p166 = pneg %p165
      // Predicated region
      $region9: #{feed_forward.1} parent=5 // pred_check
        _
      $region10: #{feed_forward.1} parent=5 // pred_check_branch
        %168 = sbr.rel (%p165) target = $region12
      $region11: #{feed_forward.1} parent=5 // pred_region
        %s169 = ssub.s32 %s19, 1
        // Predicated region
        $region13: #{feed_forward.1} parent=11 // pred_check
          %p170 = pneg %p66
        $region14: #{feed_forward.1} parent=11 // pred_check_branch
          %172 = sbr.rel (%p170) target = $region16
        $region15: #{feed_forward.1} parent=11 // pred_region
          %s174 = ssub.s32 8192, 8192
          %175 = vsyncadd [#allocation6], %s174
          %s176 = sshll.u32 [#allocation5], 4
          %s177 = int_to_ptr.vmem [resolvable:$true] %s176
          %182 = dma.hbm_to_vmem [thread:$0]  %s1, 8192, %s177, [#allocation6], 512, 512, 32
        $region16: #{feed_forward.1} parent=11 // pred_fallthru
          _
        // Predicated region
        $region17: #{feed_forward.1} parent=11 // pred_check
          %p183 = pneg %p87
        $region18: #{feed_forward.1} parent=11 // pred_check_branch
          %185 = sbr.rel (%p183) target = $region20
        $region19: #{feed_forward.1} parent=11 // pred_region
          %s187 = ssub.s32 64, 64
          %188 = vsyncadd [#allocation6], %s187
          %s190 = sshll.u32 [#allocation7], 4
          %s191 = int_to_ptr.vmem [resolvable:$true] %s190
          %193 = dma.hbm_to_vmem [thread:$0]  %s2, 64, %s191, [#allocation6]
        $region20: #{feed_forward.1} parent=11 // pred_fallthru
          _
        // Predicated region
        $region21: #{feed_forward.1} parent=11 // pred_check
          %p194 = pneg %p108
        $region22: #{feed_forward.1} parent=11 // pred_check_branch
          %196 = sbr.rel (%p194) target = $region24
        $region23: #{feed_forward.1} parent=11 // pred_region
          %s198 = ssub.s32 8192, 8192
          %199 = vsyncadd [#allocation9], %s198
          %s200 = sshll.u32 [#allocation8], 4
          %s201 = int_to_ptr.vmem [resolvable:$true] %s200
          %206 = dma.hbm_to_vmem [thread:$0]  %s3, 8192, %s201, [#allocation9], 128, 128, 8
        $region24: #{feed_forward.1} parent=11 // pred_fallthru
          _
        // Predicated region
        $region25: #{feed_forward.1} parent=11 // pred_check
          %p207 = pneg %p129
        $region26: #{feed_forward.1} parent=11 // pred_check_branch
          %209 = sbr.rel (%p207) target = $region28
        $region27: #{feed_forward.1} parent=11 // pred_region
          %s211 = ssub.s32 16, 16
          %212 = vsyncadd [#allocation9], %s211
          %s214 = sshll.u32 [#allocation10], 4
          %s215 = int_to_ptr.vmem [resolvable:$true] %s214
          %217 = dma.hbm_to_vmem [thread:$0]  %s4, 16, %s215, [#allocation9]
        $region28: #{feed_forward.1} parent=11 // pred_fallthru
          _
      $region12: #{feed_forward.1} parent=5 // pred_fallthru
        _
      %p218 = scmp.lt.s32.totalorder %s19, 4
      // Predicated region
      $region29: #{feed_forward.1} parent=5 // pred_check
        %p219 = pneg %p218
      $region30: #{feed_forward.1} parent=5 // pred_check_branch
        %221 = sbr.rel (%p219) target = $region32
      $region31: #{feed_forward.1} parent=5 // pred_region
        // Predicated region
        $region33: #{feed_forward.1} parent=31 // pred_check
          %p222 = pneg %p39
        $region34: #{feed_forward.1} parent=31 // pred_check_branch
          %224 = sbr.rel (%p222) target = $region36
        $region35: #{feed_forward.1} parent=31 // pred_region
          %s225 = sand.u32 %s29, 1
          %s226 = scalar_lea.sflag [#allocation3], %s225
          %s227 = sand.u32 %s29, 1
          %s228 = smul.addr %s227, 256
          %s229 = scalar_lea.vmem [#allocation2], %s228
          %s230 = smul.u32 32, %s19
          %s232 = ssub.s32 4096, 4096
          %233 = vsyncadd %s226, %s232
          %s234 = smul.addr %s230, 128
          %s235 = scalar_lea.hbm %s0, %s234
          %s236 = sshll.u32 %s229, 4
          %s237 = int_to_ptr.vmem [resolvable:$true] %s236
          %242 = dma.hbm_to_vmem [thread:$0]  %s235, 4096, %s237, %s226, 128, 128, 8
        $region36: #{feed_forward.1} parent=31 // pred_fallthru
          _
      $region32: #{feed_forward.1} parent=5 // pred_fallthru
        _
      %p243 = scmp.le.s32.totalorder 1, %s19
      %p244 = scmp.lt.s32.totalorder %s19, 5
      %p245 = pnand %p243, %p244
      %p246 = pneg %p245
      // Predicated region
      $region37: #{feed_forward.1} parent=5 // pred_check
        _
      $region38: #{feed_forward.1} parent=5 // pred_check_branch
        %248 = sbr.rel (%p245) target = $region40
      $region39: #{feed_forward.1} parent=5 // pred_region
        %s249 = ssub.s32 %s19, 1
        %s250 = sand.u32 %s32, 1
        %s251 = scalar_lea.sflag [#allocation3], %s250
        %s252 = sand.u32 %s32, 1
        %s253 = smul.addr %s252, 256
        %s254 = scalar_lea.vmem [#allocation2], %s253
        // Predicated region
        $region41: #{feed_forward.1} parent=39 // pred_check
          %p255 = pneg %p45
        $region42: #{feed_forward.1} parent=39 // pred_check_branch
          %257 = sbr.rel (%p255) target = $region44
        $region43: #{feed_forward.1} parent=39 // pred_region
          %258 = dma.done %s251, 4096
        $region44: #{feed_forward.1} parent=39 // pred_fallthru
          _
        // Predicated region
        $region45: #{feed_forward.1} parent=39 // pred_check
          %p259 = pneg %p66
        $region46: #{feed_forward.1} parent=39 // pred_check_branch
          %261 = sbr.rel (%p259) target = $region48
        $region47: #{feed_forward.1} parent=39 // pred_region
          %262 = dma.done [#allocation6], 8192
        $region48: #{feed_forward.1} parent=39 // pred_fallthru
          _
        // Predicated region
        $region49: #{feed_forward.1} parent=39 // pred_check
          %p263 = pneg %p87
        $region50: #{feed_forward.1} parent=39 // pred_check_branch
          %265 = sbr.rel (%p263) target = $region52
        $region51: #{feed_forward.1} parent=39 // pred_region
          %266 = dma.done [#allocation6], 64
        $region52: #{feed_forward.1} parent=39 // pred_fallthru
          _
        // Predicated region
        $region53: #{feed_forward.1} parent=39 // pred_check
          %p267 = pneg %p108
        $region54: #{feed_forward.1} parent=39 // pred_check_branch
          %269 = sbr.rel (%p267) target = $region56
        $region55: #{feed_forward.1} parent=39 // pred_region
          %270 = dma.done [#allocation9], 8192
        $region56: #{feed_forward.1} parent=39 // pred_fallthru
          _
        // Predicated region
        $region57: #{feed_forward.1} parent=39 // pred_check
          %p271 = pneg %p129
        $region58: #{feed_forward.1} parent=39 // pred_check_branch
          %273 = sbr.rel (%p271) target = $region60
        $region59: #{feed_forward.1} parent=39 // pred_region
          %274 = dma.done [#allocation9], 16
        $region60: #{feed_forward.1} parent=39 // pred_fallthru
          _
        %s275 = sand.u32 %s32, 1
        %s276 = scalar_lea.sflag [#allocation3], %s275
        %s277 = sand.u32 %s32, 1
        %s278 = smul.addr %s277, 256
        %s279 = scalar_lea.vmem [#allocation2], %s278
        %p280 = pneg %p45
        %p281 = pneg %p42
        %p282 = pneg %p66
        %p283 = pneg %p63
        %p284 = pneg %p87
        %p285 = pneg %p84
        %p286 = pneg %p108
        %p287 = pneg %p105
        %p288 = pneg %p129
        %p289 = pneg %p126
        %p290 = pneg %p155
        %p291 = pneg %p152
        %s292 = sand.u32 %s142, 1
        %s293 = scalar_lea.sflag [#allocation4], %s292
        %s294 = sand.u32 %s142, 1
        %s295 = smul.addr %s294, 256
        %s296 = scalar_lea.vmem [#allocation11], %s295
        %s297 = smul.u32 32, %s24
        %s298 = smul.u32 32, %s24
        %v299 = vld [vmem:[%s254] sm:$0xff]
        %v300 = vld [vmem:[%s254 + $0x8] sm:$0xff]
        %v301 = vld [vmem:[%s254 + $0x10] sm:$0xff]
        %v302 = vld [vmem:[%s254 + $0x18] sm:$0xff]
        %v303 = vld [vmem:[%s254 + $0x20] sm:$0xff]
        %v304 = vld [vmem:[%s254 + $0x28] sm:$0xff]
        %v305 = vld [vmem:[%s254 + $0x30] sm:$0xff]
        %v306 = vld [vmem:[%s254 + $0x38] sm:$0xff]
        %v307 = vld [vmem:[%s254 + $0x40] sm:$0xff]
        %v308 = vld [vmem:[%s254 + $0x48] sm:$0xff]
        %v309 = vld [vmem:[%s254 + $0x50] sm:$0xff]
        %v310 = vld [vmem:[%s254 + $0x58] sm:$0xff]
        %v311 = vld [vmem:[%s254 + $0x60] sm:$0xff]
        %v312 = vld [vmem:[%s254 + $0x68] sm:$0xff]
        %v313 = vld [vmem:[%s254 + $0x70] sm:$0xff]
        %v314 = vld [vmem:[%s254 + $0x78] sm:$0xff]
        %v315 = vld [vmem:[%s254 + $0x80] sm:$0xff]
        %v316 = vld [vmem:[%s254 + $0x88] sm:$0xff]
        %v317 = vld [vmem:[%s254 + $0x90] sm:$0xff]
        %v318 = vld [vmem:[%s254 + $0x98] sm:$0xff]
        %v319 = vld [vmem:[%s254 + $0xa0] sm:$0xff]
        %v320 = vld [vmem:[%s254 + $0xa8] sm:$0xff]
        %v321 = vld [vmem:[%s254 + $0xb0] sm:$0xff]
        %v322 = vld [vmem:[%s254 + $0xb8] sm:$0xff]
        %v323 = vld [vmem:[%s254 + $0xc0] sm:$0xff]
        %v324 = vld [vmem:[%s254 + $0xc8] sm:$0xff]
        %v325 = vld [vmem:[%s254 + $0xd0] sm:$0xff]
        %v326 = vld [vmem:[%s254 + $0xd8] sm:$0xff]
        %v327 = vld [vmem:[%s254 + $0xe0] sm:$0xff]
        %v328 = vld [vmem:[%s254 + $0xe8] sm:$0xff]
        %v329 = vld [vmem:[%s254 + $0xf0] sm:$0xff]
        %v330 = vld [vmem:[%s254 + $0xf8] sm:$0xff]
        %v331 = vld [vmem:[#allocation5] sm:$0xff]
        %v332 = vld [vmem:[#allocation5 + $0x8] sm:$0xff]
        %v333 = vld [vmem:[#allocation5 + $0x10] sm:$0xff]
        %v334 = vld [vmem:[#allocation5 + $0x18] sm:$0xff]
        %v335 = vld [vmem:[#allocation5 + $0x20] sm:$0xff]
        %v336 = vld [vmem:[#allocation5 + $0x28] sm:$0xff]
        %v337 = vld [vmem:[#allocation5 + $0x30] sm:$0xff]
        %v338 = vld [vmem:[#allocation5 + $0x38] sm:$0xff]
        %v339 = vld [vmem:[#allocation5 + $0x40] sm:$0xff]
        %v340 = vld [vmem:[#allocation5 + $0x48] sm:$0xff]
        %v341 = vld [vmem:[#allocation5 + $0x50] sm:$0xff]
        %v342 = vld [vmem:[#allocation5 + $0x58] sm:$0xff]
        %v343 = vld [vmem:[#allocation5 + $0x60] sm:$0xff]
        %v344 = vld [vmem:[#allocation5 + $0x68] sm:$0xff]
        %v345 = vld [vmem:[#allocation5 + $0x70] sm:$0xff]
        %v346 = vld [vmem:[#allocation5 + $0x78] sm:$0xff]
        %v347 = vld [vmem:[#allocation5 + $0x80] sm:$0xff]
        %v348 = vld [vmem:[#allocation5 + $0x88] sm:$0xff]
        %v349 = vld [vmem:[#allocation5 + $0x90] sm:$0xff]
        %v350 = vld [vmem:[#allocation5 + $0x98] sm:$0xff]
        %v351 = vld [vmem:[#allocation5 + $0xa0] sm:$0xff]
        %v352 = vld [vmem:[#allocation5 + $0xa8] sm:$0xff]
        %v353 = vld [vmem:[#allocation5 + $0xb0] sm:$0xff]
        %v354 = vld [vmem:[#allocation5 + $0xb8] sm:$0xff]
        %v355 = vld [vmem:[#allocation5 + $0xc0] sm:$0xff]
        %v356 = vld [vmem:[#allocation5 + $0xc8] sm:$0xff]
        %v357 = vld [vmem:[#allocation5 + $0xd0] sm:$0xff]
        %v358 = vld [vmem:[#allocation5 + $0xd8] sm:$0xff]
        %v359 = vld [vmem:[#allocation5 + $0xe0] sm:$0xff]
        %v360 = vld [vmem:[#allocation5 + $0xe8] sm:$0xff]
        %v361 = vld [vmem:[#allocation5 + $0xf0] sm:$0xff]
        %v362 = vld [vmem:[#allocation5 + $0xf8] sm:$0xff]
        %v363 = vld [vmem:[#allocation5 + $0x100] sm:$0xff]
        %v364 = vld [vmem:[#allocation5 + $0x108] sm:$0xff]
        %v365 = vld [vmem:[#allocation5 + $0x110] sm:$0xff]
        %v366 = vld [vmem:[#allocation5 + $0x118] sm:$0xff]
        %v367 = vld [vmem:[#allocation5 + $0x120] sm:$0xff]
        %v368 = vld [vmem:[#allocation5 + $0x128] sm:$0xff]
        %v369 = vld [vmem:[#allocation5 + $0x130] sm:$0xff]
        %v370 = vld [vmem:[#allocation5 + $0x138] sm:$0xff]
        %v371 = vld [vmem:[#allocation5 + $0x140] sm:$0xff]
        %v372 = vld [vmem:[#allocation5 + $0x148] sm:$0xff]
        %v373 = vld [vmem:[#allocation5 + $0x150] sm:$0xff]
        %v374 = vld [vmem:[#allocation5 + $0x158] sm:$0xff]
        %v375 = vld [vmem:[#allocation5 + $0x160] sm:$0xff]
        %v376 = vld [vmem:[#allocation5 + $0x168] sm:$0xff]
        %v377 = vld [vmem:[#allocation5 + $0x170] sm:$0xff]
        %v378 = vld [vmem:[#allocation5 + $0x178] sm:$0xff]
        %v379 = vld [vmem:[#allocation5 + $0x180] sm:$0xff]
        %v380 = vld [vmem:[#allocation5 + $0x188] sm:$0xff]
        %v381 = vld [vmem:[#allocation5 + $0x190] sm:$0xff]
        %v382 = vld [vmem:[#allocation5 + $0x198] sm:$0xff]
        %v383 = vld [vmem:[#allocation5 + $0x1a0] sm:$0xff]
        %v384 = vld [vmem:[#allocation5 + $0x1a8] sm:$0xff]
        %v385 = vld [vmem:[#allocation5 + $0x1b0] sm:$0xff]
        %v386 = vld [vmem:[#allocation5 + $0x1b8] sm:$0xff]
        %v387 = vld [vmem:[#allocation5 + $0x1c0] sm:$0xff]
        %v388 = vld [vmem:[#allocation5 + $0x1c8] sm:$0xff]
        %v389 = vld [vmem:[#allocation5 + $0x1d0] sm:$0xff]
        %v390 = vld [vmem:[#allocation5 + $0x1d8] sm:$0xff]
        %v391 = vld [vmem:[#allocation5 + $0x1e0] sm:$0xff]
        %v392 = vld [vmem:[#allocation5 + $0x1e8] sm:$0xff]
        %v393 = vld [vmem:[#allocation5 + $0x1f0] sm:$0xff]
        %v394 = vld [vmem:[#allocation5 + $0x1f8] sm:$0xff]
        %v395 = vld [vmem:[#allocation7] sm:$0xf]
        %v397 = vlaneseq
        %v398 = vshrl.u32 %v397, 7
        %v399 = vsub.s32 0, %v398
        %v400 = vrot.slane %v395, %v399
        %v401 = vlaneseq
        %v402 = vshrl.u32 %v401, 7
        %v403 = vsub.s32 1, %v402
        %v404 = vrot.slane %v395, %v403
        %v405 = vlaneseq
        %v406 = vshrl.u32 %v405, 7
        %v407 = vsub.s32 2, %v406
        %v408 = vrot.slane %v395, %v407
        %v409 = vlaneseq
        %v410 = vshrl.u32 %v409, 7
        %v411 = vsub.s32 3, %v410
        %v412 = vrot.slane %v395, %v411
        %417 = vmatprep.subr.mxu0 %v332
        %418 = vmatpush1.msra.mxu0 %v331
        %419 = vmatprep.subr.mxu0 %v336
        %420 = vmatpush1.msra.mxu0 %v335
        %421 = vmatprep.subr.mxu0 %v340
        %422 = vmatpush1.msra.mxu0 %v339
        %423 = vmatprep.subr.mxu0 %v344
        %424 = vmatpush1.msra.mxu0 %v343
        %425 = vmatprep.subr.mxu0 %v348
        %426 = vmatpush1.msra.mxu0 %v347
        %427 = vmatprep.subr.mxu0 %v352
        %428 = vmatpush1.msra.mxu0 %v351
        %429 = vmatprep.subr.mxu0 %v356
        %430 = vmatpush1.msra.mxu0 %v355
        %431 = vmatprep.subr.mxu0 %v360
        %432 = vmatpush1.msra.mxu0 %v359
        %433 = vmatprep.subr.mxu0 %v364
        %434 = vmatpush1.msra.mxu0 %v363
        %435 = vmatprep.subr.mxu0 %v368
        %436 = vmatpush1.msra.mxu0 %v367
        %437 = vmatprep.subr.mxu0 %v372
        %438 = vmatpush1.msra.mxu0 %v371
        %439 = vmatprep.subr.mxu0 %v376
        %440 = vmatpush1.msra.mxu0 %v375
        %441 = vmatprep.subr.mxu0 %v380
        %442 = vmatpush1.msra.mxu0 %v379
        %443 = vmatprep.subr.mxu0 %v384
        %444 = vmatpush1.msra.mxu0 %v383
        %445 = vmatprep.subr.mxu0 %v388
        %446 = vmatpush1.msra.mxu0 %v387
        %447 = vmatprep.subr.mxu0 %v392
        %448 = vmatpush1.msra.mxu0 %v391
        %449 = vmatprep.subr.mxu0 0.0
        %450 = vmatpush1.msra.mxu0 0.0
        %451 = vmatprep.subr.mxu0 0.0
        %452 = vmatpush1.msra.mxu0 0.0
        %453 = vmatprep.subr.mxu0 0.0
        %454 = vmatpush1.msra.mxu0 0.0
        %455 = vmatprep.subr.mxu0 0.0
        %456 = vmatpush1.msra.mxu0 0.0
        %457 = vmatprep.subr.mxu0 0.0
        %458 = vmatpush1.msra.mxu0 0.0
        %459 = vmatprep.subr.mxu0 0.0
        %460 = vmatpush1.msra.mxu0 0.0
        %461 = vmatprep.subr.mxu0 0.0
        %462 = vmatpush1.msra.mxu0 0.0
        %463 = vmatprep.subr.mxu0 0.0
        %464 = vmatpush1.msra.mxu0 0.0
        %465 = vmatprep.subr.mxu0 0.0
        %466 = vmatpush1.msra.mxu0 0.0
        %467 = vmatprep.subr.mxu0 0.0
        %468 = vmatpush1.msra.mxu0 0.0
        %469 = vmatprep.subr.mxu0 0.0
        %470 = vmatpush1.msra.mxu0 0.0
        %471 = vmatprep.subr.mxu0 0.0
        %472 = vmatpush1.msra.mxu0 0.0
        %473 = vmatprep.subr.mxu0 0.0
        %474 = vmatpush1.msra.mxu0 0.0
        %475 = vmatprep.subr.mxu0 0.0
        %476 = vmatpush1.msra.mxu0 0.0
        %477 = vmatprep.subr.mxu0 0.0
        %478 = vmatpush1.msra.mxu0 0.0
        %479 = vmatprep.subr.mxu0 0.0
        %480 = vmatpush1.msra.mxu0 0.0
        %481 = vmatprep.mubr.f32.mxu0 0.0
        %482 = vmatmul.mubr.f32.gmra.mrb[0].mxu0 %v299
        %v483 = vpop.f32.mrb[0].mxu0
        %v484 = vadd.f32 %v400, %v483
        %v485 = vpop.f32.mrb[0].mxu0
        %v486 = vadd.f32 %v404, %v485
        %487 = vmatprep.mubr.f32.mxu0 0.0
        %488 = vmatmul.mubr.f32.gmra.mrb[0].mxu0 %v300
        %v489 = vpop.f32.mrb[0].mxu0
        %v490 = vadd.f32 %v400, %v489
        %v491 = vpop.f32.mrb[0].mxu0
        %v492 = vadd.f32 %v404, %v491
        %493 = vmatprep.mubr.f32.mxu0 0.0
        %494 = vmatmul.mubr.f32.gmra.mrb[0].mxu0 %v301
        %v495 = vpop.f32.mrb[0].mxu0
        %v496 = vadd.f32 %v400, %v495
        %v497 = vpop.f32.mrb[0].mxu0
        %v498 = vadd.f32 %v404, %v497
        %499 = vmatprep.mubr.f32.mxu0 0.0
        %500 = vmatmul.mubr.f32.gmra.mrb[0].mxu0 %v302
        %v501 = vpop.f32.mrb[0].mxu0
        %v502 = vadd.f32 %v400, %v501
        %v503 = vpop.f32.mrb[0].mxu0
        %v504 = vadd.f32 %v404, %v503
        %505 = vmatprep.mubr.f32.mxu0 0.0
        %506 = vmatmul.mubr.f32.gmra.mrb[0].mxu0 %v303
        %v507 = vpop.f32.mrb[0].mxu0
        %v508 = vadd.f32 %v400, %v507
        %v509 = vpop.f32.mrb[0].mxu0
        %v510 = vadd.f32 %v404, %v509
        %511 = vmatprep.mubr.f32.mxu0 0.0
        %512 = vmatmul.mubr.f32.gmra.mrb[0].mxu0 %v304
        %v513 = vpop.f32.mrb[0].mxu0
        %v514 = vadd.f32 %v400, %v513
        %v515 = vpop.f32.mrb[0].mxu0
        %v516 = vadd.f32 %v404, %v515
        %517 = vmatprep.mubr.f32.mxu0 0.0
        %518 = vmatmul.mubr.f32.gmra.mrb[0].mxu0 %v305
        %v519 = vpop.f32.mrb[0].mxu0
        %v520 = vadd.f32 %v400, %v519
        %v521 = vpop.f32.mrb[0].mxu0
        %v522 = vadd.f32 %v404, %v521
        %523 = vmatprep.mubr.f32.mxu0 0.0
        %524 = vmatmul.mubr.f32.gmra.mrb[0].mxu0 %v306
        %v525 = vpop.f32.mrb[0].mxu0
        %v526 = vadd.f32 %v400, %v525
        %v527 = vpop.f32.mrb[0].mxu0
        %v528 = vadd.f32 %v404, %v527
        %529 = vmatprep.mubr.f32.mxu0 0.0
        %530 = vmatmul.mubr.f32.gmra.mrb[0].mxu0 %v307
        %v531 = vpop.f32.mrb[0].mxu0
        %v532 = vadd.f32 %v400, %v531
        %v533 = vpop.f32.mrb[0].mxu0
        %v534 = vadd.f32 %v404, %v533
        %535 = vmatprep.mubr.f32.mxu0 0.0
        %536 = vmatmul.mubr.f32.gmra.mrb[0].mxu0 %v308
        %v537 = vpop.f32.mrb[0].mxu0
        %v538 = vadd.f32 %v400, %v537
        %v539 = vpop.f32.mrb[0].mxu0
        %v540 = vadd.f32 %v404, %v539
        %541 = vmatprep.mubr.f32.mxu0 0.0
        %542 = vmatmul.mubr.f32.gmra.mrb[0].mxu0 %v309
        %v543 = vpop.f32.mrb[0].mxu0
        %v544 = vadd.f32 %v400, %v543
        %v545 = vpop.f32.mrb[0].mxu0
        %v546 = vadd.f32 %v404, %v545
        %547 = vmatprep.mubr.f32.mxu0 0.0
        %548 = vmatmul.mubr.f32.gmra.mrb[0].mxu0 %v310
        %v549 = vpop.f32.mrb[0].mxu0
        %v550 = vadd.f32 %v400, %v549
        %v551 = vpop.f32.mrb[0].mxu0
        %v552 = vadd.f32 %v404, %v551
        %553 = vmatprep.mubr.f32.mxu0 0.0
        %554 = vmatmul.mubr.f32.gmra.mrb[0].mxu0 %v311
        %v555 = vpop.f32.mrb[0].mxu0
        %v556 = vadd.f32 %v400, %v555
        %v557 = vpop.f32.mrb[0].mxu0
        %v558 = vadd.f32 %v404, %v557
        %559 = vmatprep.mubr.f32.mxu0 0.0
        %560 = vmatmul.mubr.f32.gmra.mrb[0].mxu0 %v312
        %v561 = vpop.f32.mrb[0].mxu0
        %v562 = vadd.f32 %v400, %v561
        %v563 = vpop.f32.mrb[0].mxu0
        %v564 = vadd.f32 %v404, %v563
        %565 = vmatprep.mubr.f32.mxu0 0.0
        %566 = vmatmul.mubr.f32.gmra.mrb[0].mxu0 %v313
        %v567 = vpop.f32.mrb[0].mxu0
        %v568 = vadd.f32 %v400, %v567
        %v569 = vpop.f32.mrb[0].mxu0
        %v570 = vadd.f32 %v404, %v569
        %571 = vmatprep.mubr.f32.mxu0 0.0
        %572 = vmatmul.mubr.f32.gmra.mrb[0].mxu0 %v314
        %v573 = vpop.f32.mrb[0].mxu0
        %v574 = vadd.f32 %v400, %v573
        %v575 = vpop.f32.mrb[0].mxu0
        %v576 = vadd.f32 %v404, %v575
        %577 = vmatprep.mubr.f32.mxu0 0.0
        %578 = vmatmul.mubr.f32.gmra.mrb[0].mxu0 %v315
        %v579 = vpop.f32.mrb[0].mxu0
        %v580 = vadd.f32 %v400, %v579
        %v581 = vpop.f32.mrb[0].mxu0
        %v582 = vadd.f32 %v404, %v581
        %583 = vmatprep.mubr.f32.mxu0 0.0
        %584 = vmatmul.mubr.f32.gmra.mrb[0].mxu0 %v316
        %v585 = vpop.f32.mrb[0].mxu0
        %v586 = vadd.f32 %v400, %v585
        %v587 = vpop.f32.mrb[0].mxu0
        %v588 = vadd.f32 %v404, %v587
        %589 = vmatprep.mubr.f32.mxu0 0.0
        %590 = vmatmul.mubr.f32.gmra.mrb[0].mxu0 %v317
        %v591 = vpop.f32.mrb[0].mxu0
        %v592 = vadd.f32 %v400, %v591
        %v593 = vpop.f32.mrb[0].mxu0
        %v594 = vadd.f32 %v404, %v593
        %595 = vmatprep.mubr.f32.mxu0 0.0
        %596 = vmatmul.mubr.f32.gmra.mrb[0].mxu0 %v318
        %v597 = vpop.f32.mrb[0].mxu0
        %v598 = vadd.f32 %v400, %v597
        %v599 = vpop.f32.mrb[0].mxu0
        %v600 = vadd.f32 %v404, %v599
        %601 = vmatprep.mubr.f32.mxu0 0.0
        %602 = vmatmul.mubr.f32.gmra.mrb[0].mxu0 %v319
        %v603 = vpop.f32.mrb[0].mxu0
        %v604 = vadd.f32 %v400, %v603
        %v605 = vpop.f32.mrb[0].mxu0
        %v606 = vadd.f32 %v404, %v605
        %607 = vmatprep.mubr.f32.mxu0 0.0
        %608 = vmatmul.mubr.f32.gmra.mrb[0].mxu0 %v320
        %v609 = vpop.f32.mrb[0].mxu0
        %v610 = vadd.f32 %v400, %v609
        %v611 = vpop.f32.mrb[0].mxu0
        %v612 = vadd.f32 %v404, %v611
        %613 = vmatprep.mubr.f32.mxu0 0.0
        %614 = vmatmul.mubr.f32.gmra.mrb[0].mxu0 %v321
        %v615 = vpop.f32.mrb[0].mxu0
        %v616 = vadd.f32 %v400, %v615
        %v617 = vpop.f32.mrb[0].mxu0
        %v618 = vadd.f32 %v404, %v617
        %619 = vmatprep.mubr.f32.mxu0 0.0
        %620 = vmatmul.mubr.f32.gmra.mrb[0].mxu0 %v322
        %v621 = vpop.f32.mrb[0].mxu0
        %v622 = vadd.f32 %v400, %v621
        %v623 = vpop.f32.mrb[0].mxu0
        %v624 = vadd.f32 %v404, %v623
        %625 = vmatprep.mubr.f32.mxu0 0.0
        %626 = vmatmul.mubr.f32.gmra.mrb[0].mxu0 %v323
        %v627 = vpop.f32.mrb[0].mxu0
        %v628 = vadd.f32 %v400, %v627
        %v629 = vpop.f32.mrb[0].mxu0
        %v630 = vadd.f32 %v404, %v629
        %631 = vmatprep.mubr.f32.mxu0 0.0
        %632 = vmatmul.mubr.f32.gmra.mrb[0].mxu0 %v324
        %v633 = vpop.f32.mrb[0].mxu0
        %v634 = vadd.f32 %v400, %v633
        %v635 = vpop.f32.mrb[0].mxu0
        %v636 = vadd.f32 %v404, %v635
        %637 = vmatprep.mubr.f32.mxu0 0.0
        %638 = vmatmul.mubr.f32.gmra.mrb[0].mxu0 %v325
        %v639 = vpop.f32.mrb[0].mxu0
        %v640 = vadd.f32 %v400, %v639
        %v641 = vpop.f32.mrb[0].mxu0
        %v642 = vadd.f32 %v404, %v641
        %643 = vmatprep.mubr.f32.mxu0 0.0
        %644 = vmatmul.mubr.f32.gmra.mrb[0].mxu0 %v326
        %v645 = vpop.f32.mrb[0].mxu0
        %v646 = vadd.f32 %v400, %v645
        %v647 = vpop.f32.mrb[0].mxu0
        %v648 = vadd.f32 %v404, %v647
        %649 = vmatprep.mubr.f32.mxu0 0.0
        %650 = vmatmul.mubr.f32.gmra.mrb[0].mxu0 %v327
        %v651 = vpop.f32.mrb[0].mxu0
        %v652 = vadd.f32 %v400, %v651
        %v653 = vpop.f32.mrb[0].mxu0
        %v654 = vadd.f32 %v404, %v653
        %655 = vmatprep.mubr.f32.mxu0 0.0
        %656 = vmatmul.mubr.f32.gmra.mrb[0].mxu0 %v328
        %v657 = vpop.f32.mrb[0].mxu0
        %v658 = vadd.f32 %v400, %v657
        %v659 = vpop.f32.mrb[0].mxu0
        %v660 = vadd.f32 %v404, %v659
        %661 = vmatprep.mubr.f32.mxu0 0.0
        %662 = vmatmul.mubr.f32.gmra.mrb[0].mxu0 %v329
        %v663 = vpop.f32.mrb[0].mxu0
        %v664 = vadd.f32 %v400, %v663
        %v665 = vpop.f32.mrb[0].mxu0
        %v666 = vadd.f32 %v404, %v665
        %667 = vmatprep.mubr.f32.mxu0 0.0
        %668 = vmatmul.mubr.f32.gmra.mrb[0].mxu0 %v330
        %v669 = vpop.f32.mrb[0].mxu0
        %v670 = vadd.f32 %v400, %v669
        %v671 = vpop.f32.mrb[0].mxu0
        %v672 = vadd.f32 %v404, %v671
        %673 = vdwg.mxu0
        %674 = vmatprep.subr.mxu0 %v334
        %675 = vmatpush1.msra.mxu0 %v333
        %676 = vmatprep.subr.mxu0 %v338
        %677 = vmatpush1.msra.mxu0 %v337
        %678 = vmatprep.subr.mxu0 %v342
        %679 = vmatpush1.msra.mxu0 %v341
        %680 = vmatprep.subr.mxu0 %v346
        %681 = vmatpush1.msra.mxu0 %v345
        %682 = vmatprep.subr.mxu0 %v350
        %683 = vmatpush1.msra.mxu0 %v349
        %684 = vmatprep.subr.mxu0 %v354
        %685 = vmatpush1.msra.mxu0 %v353
        %686 = vmatprep.subr.mxu0 %v358
        %687 = vmatpush1.msra.mxu0 %v357
        %688 = vmatprep.subr.mxu0 %v362
        %689 = vmatpush1.msra.mxu0 %v361
        %690 = vmatprep.subr.mxu0 %v366
        %691 = vmatpush1.msra.mxu0 %v365
        %692 = vmatprep.subr.mxu0 %v370
        %693 = vmatpush1.msra.mxu0 %v369
        %694 = vmatprep.subr.mxu0 %v374
        %695 = vmatpush1.msra.mxu0 %v373
        %696 = vmatprep.subr.mxu0 %v378
        %697 = vmatpush1.msra.mxu0 %v377
        %698 = vmatprep.subr.mxu0 %v382
        %699 = vmatpush1.msra.mxu0 %v381
        %700 = vmatprep.subr.mxu0 %v386
        %701 = vmatpush1.msra.mxu0 %v385
        %702 = vmatprep.subr.mxu0 %v390
        %703 = vmatpush1.msra.mxu0 %v389
        %704 = vmatprep.subr.mxu0 %v394
        %705 = vmatpush1.msra.mxu0 %v393
        %706 = vmatprep.subr.mxu0 0.0
        %707 = vmatpush1.msra.mxu0 0.0
        %708 = vmatprep.subr.mxu0 0.0
        %709 = vmatpush1.msra.mxu0 0.0
        %710 = vmatprep.subr.mxu0 0.0
        %711 = vmatpush1.msra.mxu0 0.0
        %712 = vmatprep.subr.mxu0 0.0
        %713 = vmatpush1.msra.mxu0 0.0
        %714 = vmatprep.subr.mxu0 0.0
        %715 = vmatpush1.msra.mxu0 0.0
        %716 = vmatprep.subr.mxu0 0.0
        %717 = vmatpush1.msra.mxu0 0.0
        %718 = vmatprep.subr.mxu0 0.0
        %719 = vmatpush1.msra.mxu0 0.0
        %720 = vmatprep.subr.mxu0 0.0
        %721 = vmatpush1.msra.mxu0 0.0
        %722 = vmatprep.subr.mxu0 0.0
        %723 = vmatpush1.msra.mxu0 0.0
        %724 = vmatprep.subr.mxu0 0.0
        %725 = vmatpush1.msra.mxu0 0.0
        %726 = vmatprep.subr.mxu0 0.0
        %727 = vmatpush1.msra.mxu0 0.0
        %728 = vmatprep.subr.mxu0 0.0
        %729 = vmatpush1.msra.mxu0 0.0
        %730 = vmatprep.subr.mxu0 0.0
        %731 = vmatpush1.msra.mxu0 0.0
        %732 = vmatprep.subr.mxu0 0.0
        %733 = vmatpush1.msra.mxu0 0.0
        %734 = vmatprep.subr.mxu0 0.0
        %735 = vmatpush1.msra.mxu0 0.0
        %736 = vmatprep.subr.mxu0 0.0
        %737 = vmatpush1.msra.mxu0 0.0
        %738 = vmatprep.mubr.f32.mxu0 0.0
        %739 = vmatmul.mubr.f32.gmra.mrb[0].mxu0 %v299
        %v740 = vpop.f32.mrb[0].mxu0
        %v741 = vadd.f32 %v408, %v740
        %v742 = vpop.f32.mrb[0].mxu0
        %v743 = vadd.f32 %v412, %v742
        %744 = vmatprep.mubr.f32.mxu0 0.0
        %745 = vmatmul.mubr.f32.gmra.mrb[0].mxu0 %v300
        %v746 = vpop.f32.mrb[0].mxu0
        %v747 = vadd.f32 %v408, %v746
        %v748 = vpop.f32.mrb[0].mxu0
        %v749 = vadd.f32 %v412, %v748
        %750 = vmatprep.mubr.f32.mxu0 0.0
        %751 = vmatmul.mubr.f32.gmra.mrb[0].mxu0 %v301
        %v752 = vpop.f32.mrb[0].mxu0
        %v753 = vadd.f32 %v408, %v752
        %v754 = vpop.f32.mrb[0].mxu0
        %v755 = vadd.f32 %v412, %v754
        %756 = vmatprep.mubr.f32.mxu0 0.0
        %757 = vmatmul.mubr.f32.gmra.mrb[0].mxu0 %v302
        %v758 = vpop.f32.mrb[0].mxu0
        %v759 = vadd.f32 %v408, %v758
        %v760 = vpop.f32.mrb[0].mxu0
        %v761 = vadd.f32 %v412, %v760
        %762 = vmatprep.mubr.f32.mxu0 0.0
        %763 = vmatmul.mubr.f32.gmra.mrb[0].mxu0 %v303
        %v764 = vpop.f32.mrb[0].mxu0
        %v765 = vadd.f32 %v408, %v764
        %v766 = vpop.f32.mrb[0].mxu0
        %v767 = vadd.f32 %v412, %v766
        %768 = vmatprep.mubr.f32.mxu0 0.0
        %769 = vmatmul.mubr.f32.gmra.mrb[0].mxu0 %v304
        %v770 = vpop.f32.mrb[0].mxu0
        %v771 = vadd.f32 %v408, %v770
        %v772 = vpop.f32.mrb[0].mxu0
        %v773 = vadd.f32 %v412, %v772
        %774 = vmatprep.mubr.f32.mxu0 0.0
        %775 = vmatmul.mubr.f32.gmra.mrb[0].mxu0 %v305
        %v776 = vpop.f32.mrb[0].mxu0
        %v777 = vadd.f32 %v408, %v776
        %v778 = vpop.f32.mrb[0].mxu0
        %v779 = vadd.f32 %v412, %v778
        %780 = vmatprep.mubr.f32.mxu0 0.0
        %781 = vmatmul.mubr.f32.gmra.mrb[0].mxu0 %v306
        %v782 = vpop.f32.mrb[0].mxu0
        %v783 = vadd.f32 %v408, %v782
        %v784 = vpop.f32.mrb[0].mxu0
        %v785 = vadd.f32 %v412, %v784
        %786 = vmatprep.mubr.f32.mxu0 0.0
        %787 = vmatmul.mubr.f32.gmra.mrb[0].mxu0 %v307
        %v788 = vpop.f32.mrb[0].mxu0
        %v789 = vadd.f32 %v408, %v788
        %v790 = vpop.f32.mrb[0].mxu0
        %v791 = vadd.f32 %v412, %v790
        %792 = vmatprep.mubr.f32.mxu0 0.0
        %793 = vmatmul.mubr.f32.gmra.mrb[0].mxu0 %v308
        %v794 = vpop.f32.mrb[0].mxu0
        %v795 = vadd.f32 %v408, %v794
        %v796 = vpop.f32.mrb[0].mxu0
        %v797 = vadd.f32 %v412, %v796
        %798 = vmatprep.mubr.f32.mxu0 0.0
        %799 = vmatmul.mubr.f32.gmra.mrb[0].mxu0 %v309
        %v800 = vpop.f32.mrb[0].mxu0
        %v801 = vadd.f32 %v408, %v800
        %v802 = vpop.f32.mrb[0].mxu0
        %v803 = vadd.f32 %v412, %v802
        %804 = vmatprep.mubr.f32.mxu0 0.0
        %805 = vmatmul.mubr.f32.gmra.mrb[0].mxu0 %v310
        %v806 = vpop.f32.mrb[0].mxu0
        %v807 = vadd.f32 %v408, %v806
        %v808 = vpop.f32.mrb[0].mxu0
        %v809 = vadd.f32 %v412, %v808
        %810 = vmatprep.mubr.f32.mxu0 0.0
        %811 = vmatmul.mubr.f32.gmra.mrb[0].mxu0 %v311
        %v812 = vpop.f32.mrb[0].mxu0
        %v813 = vadd.f32 %v408, %v812
        %v814 = vpop.f32.mrb[0].mxu0
        %v815 = vadd.f32 %v412, %v814
        %816 = vmatprep.mubr.f32.mxu0 0.0
        %817 = vmatmul.mubr.f32.gmra.mrb[0].mxu0 %v312
        %v818 = vpop.f32.mrb[0].mxu0
        %v819 = vadd.f32 %v408, %v818
        %v820 = vpop.f32.mrb[0].mxu0
        %v821 = vadd.f32 %v412, %v820
        %822 = vmatprep.mubr.f32.mxu0 0.0
        %823 = vmatmul.mubr.f32.gmra.mrb[0].mxu0 %v313
        %v824 = vpop.f32.mrb[0].mxu0
        %v825 = vadd.f32 %v408, %v824
        %v826 = vpop.f32.mrb[0].mxu0
        %v827 = vadd.f32 %v412, %v826
        %828 = vmatprep.mubr.f32.mxu0 0.0
        %829 = vmatmul.mubr.f32.gmra.mrb[0].mxu0 %v314
        %v830 = vpop.f32.mrb[0].mxu0
        %v831 = vadd.f32 %v408, %v830
        %v832 = vpop.f32.mrb[0].mxu0
        %v833 = vadd.f32 %v412, %v832
        %834 = vmatprep.mubr.f32.mxu0 0.0
        %835 = vmatmul.mubr.f32.gmra.mrb[0].mxu0 %v315
        %v836 = vpop.f32.mrb[0].mxu0
        %v837 = vadd.f32 %v408, %v836
        %v838 = vpop.f32.mrb[0].mxu0
        %v839 = vadd.f32 %v412, %v838
        %840 = vmatprep.mubr.f32.mxu0 0.0
        %841 = vmatmul.mubr.f32.gmra.mrb[0].mxu0 %v316
        %v842 = vpop.f32.mrb[0].mxu0
        %v843 = vadd.f32 %v408, %v842
        %v844 = vpop.f32.mrb[0].mxu0
        %v845 = vadd.f32 %v412, %v844
        %846 = vmatprep.mubr.f32.mxu0 0.0
        %847 = vmatmul.mubr.f32.gmra.mrb[0].mxu0 %v317
        %v848 = vpop.f32.mrb[0].mxu0
        %v849 = vadd.f32 %v408, %v848
        %v850 = vpop.f32.mrb[0].mxu0
        %v851 = vadd.f32 %v412, %v850
        %852 = vmatprep.mubr.f32.mxu0 0.0
        %853 = vmatmul.mubr.f32.gmra.mrb[0].mxu0 %v318
        %v854 = vpop.f32.mrb[0].mxu0
        %v855 = vadd.f32 %v408, %v854
        %v856 = vpop.f32.mrb[0].mxu0
        %v857 = vadd.f32 %v412, %v856
        %858 = vmatprep.mubr.f32.mxu0 0.0
        %859 = vmatmul.mubr.f32.gmra.mrb[0].mxu0 %v319
        %v860 = vpop.f32.mrb[0].mxu0
        %v861 = vadd.f32 %v408, %v860
        %v862 = vpop.f32.mrb[0].mxu0
        %v863 = vadd.f32 %v412, %v862
        %864 = vmatprep.mubr.f32.mxu0 0.0
        %865 = vmatmul.mubr.f32.gmra.mrb[0].mxu0 %v320
        %v866 = vpop.f32.mrb[0].mxu0
        %v867 = vadd.f32 %v408, %v866
        %v868 = vpop.f32.mrb[0].mxu0
        %v869 = vadd.f32 %v412, %v868
        %870 = vmatprep.mubr.f32.mxu0 0.0
        %871 = vmatmul.mubr.f32.gmra.mrb[0].mxu0 %v321
        %v872 = vpop.f32.mrb[0].mxu0
        %v873 = vadd.f32 %v408, %v872
        %v874 = vpop.f32.mrb[0].mxu0
        %v875 = vadd.f32 %v412, %v874
        %876 = vmatprep.mubr.f32.mxu0 0.0
        %877 = vmatmul.mubr.f32.gmra.mrb[0].mxu0 %v322
        %v878 = vpop.f32.mrb[0].mxu0
        %v879 = vadd.f32 %v408, %v878
        %v880 = vpop.f32.mrb[0].mxu0
        %v881 = vadd.f32 %v412, %v880
        %882 = vmatprep.mubr.f32.mxu0 0.0
        %883 = vmatmul.mubr.f32.gmra.mrb[0].mxu0 %v323
        %v884 = vpop.f32.mrb[0].mxu0
        %v885 = vadd.f32 %v408, %v884
        %v886 = vpop.f32.mrb[0].mxu0
        %v887 = vadd.f32 %v412, %v886
        %888 = vmatprep.mubr.f32.mxu0 0.0
        %889 = vmatmul.mubr.f32.gmra.mrb[0].mxu0 %v324
        %v890 = vpop.f32.mrb[0].mxu0
        %v891 = vadd.f32 %v408, %v890
        %v892 = vpop.f32.mrb[0].mxu0
        %v893 = vadd.f32 %v412, %v892
        %894 = vmatprep.mubr.f32.mxu0 0.0
        %895 = vmatmul.mubr.f32.gmra.mrb[0].mxu0 %v325
        %v896 = vpop.f32.mrb[0].mxu0
        %v897 = vadd.f32 %v408, %v896
        %v898 = vpop.f32.mrb[0].mxu0
        %v899 = vadd.f32 %v412, %v898
        %900 = vmatprep.mubr.f32.mxu0 0.0
        %901 = vmatmul.mubr.f32.gmra.mrb[0].mxu0 %v326
        %v902 = vpop.f32.mrb[0].mxu0
        %v903 = vadd.f32 %v408, %v902
        %v904 = vpop.f32.mrb[0].mxu0
        %v905 = vadd.f32 %v412, %v904
        %906 = vmatprep.mubr.f32.mxu0 0.0
        %907 = vmatmul.mubr.f32.gmra.mrb[0].mxu0 %v327
        %v908 = vpop.f32.mrb[0].mxu0
        %v909 = vadd.f32 %v408, %v908
        %v910 = vpop.f32.mrb[0].mxu0
        %v911 = vadd.f32 %v412, %v910
        %912 = vmatprep.mubr.f32.mxu0 0.0
        %913 = vmatmul.mubr.f32.gmra.mrb[0].mxu0 %v328
        %v914 = vpop.f32.mrb[0].mxu0
        %v915 = vadd.f32 %v408, %v914
        %v916 = vpop.f32.mrb[0].mxu0
        %v917 = vadd.f32 %v412, %v916
        %918 = vmatprep.mubr.f32.mxu0 0.0
        %919 = vmatmul.mubr.f32.gmra.mrb[0].mxu0 %v329
        %v920 = vpop.f32.mrb[0].mxu0
        %v921 = vadd.f32 %v408, %v920
        %v922 = vpop.f32.mrb[0].mxu0
        %v923 = vadd.f32 %v412, %v922
        %924 = vmatprep.mubr.f32.mxu0 0.0
        %925 = vmatmul.mubr.f32.gmra.mrb[0].mxu0 %v330
        %v926 = vpop.f32.mrb[0].mxu0
        %v927 = vadd.f32 %v408, %v926
        %v928 = vpop.f32.mrb[0].mxu0
        %v929 = vadd.f32 %v412, %v928
        %930 = vdwg.mxu0
        %v931 = vmul.f32 %v484, 0.5
        %v932 = vmul.f32 %v486, 0.5
        %v933 = vmul.f32 %v741, 0.5
        %v934 = vmul.f32 %v743, 0.5
        %v935 = vmul.f32 %v490, 0.5
        %v936 = vmul.f32 %v492, 0.5
        %v937 = vmul.f32 %v747, 0.5
        %v938 = vmul.f32 %v749, 0.5
        %v939 = vmul.f32 %v496, 0.5
        %v940 = vmul.f32 %v498, 0.5
        %v941 = vmul.f32 %v753, 0.5
        %v942 = vmul.f32 %v755, 0.5
        %v943 = vmul.f32 %v502, 0.5
        %v944 = vmul.f32 %v504, 0.5
        %v945 = vmul.f32 %v759, 0.5
        %v946 = vmul.f32 %v761, 0.5
        %v947 = vmul.f32 %v508, 0.5
        %v948 = vmul.f32 %v510, 0.5
        %v949 = vmul.f32 %v765, 0.5
        %v950 = vmul.f32 %v767, 0.5
        %v951 = vmul.f32 %v514, 0.5
        %v952 = vmul.f32 %v516, 0.5
        %v953 = vmul.f32 %v771, 0.5
        %v954 = vmul.f32 %v773, 0.5
        %v955 = vmul.f32 %v520, 0.5
        %v956 = vmul.f32 %v522, 0.5
        %v957 = vmul.f32 %v777, 0.5
        %v958 = vmul.f32 %v779, 0.5
        %v959 = vmul.f32 %v526, 0.5
        %v960 = vmul.f32 %v528, 0.5
        %v961 = vmul.f32 %v783, 0.5
        %v962 = vmul.f32 %v785, 0.5
        %v963 = vmul.f32 %v532, 0.5
        %v964 = vmul.f32 %v534, 0.5
        %v965 = vmul.f32 %v789, 0.5
        %v966 = vmul.f32 %v791, 0.5
        %v967 = vmul.f32 %v538, 0.5
        %v968 = vmul.f32 %v540, 0.5
        %v969 = vmul.f32 %v795, 0.5
        %v970 = vmul.f32 %v797, 0.5
        %v971 = vmul.f32 %v544, 0.5
        %v972 = vmul.f32 %v546, 0.5
        %v973 = vmul.f32 %v801, 0.5
        %v974 = vmul.f32 %v803, 0.5
        %v975 = vmul.f32 %v550, 0.5
        %v976 = vmul.f32 %v552, 0.5
        %v977 = vmul.f32 %v807, 0.5
        %v978 = vmul.f32 %v809, 0.5
        %v979 = vmul.f32 %v556, 0.5
        %v980 = vmul.f32 %v558, 0.5
        %v981 = vmul.f32 %v813, 0.5
        %v982 = vmul.f32 %v815, 0.5
        %v983 = vmul.f32 %v562, 0.5
        %v984 = vmul.f32 %v564, 0.5
        %v985 = vmul.f32 %v819, 0.5
        %v986 = vmul.f32 %v821, 0.5
        %v987 = vmul.f32 %v568, 0.5
        %v988 = vmul.f32 %v570, 0.5
        %v989 = vmul.f32 %v825, 0.5
        %v990 = vmul.f32 %v827, 0.5
        %v991 = vmul.f32 %v574, 0.5
        %v992 = vmul.f32 %v576, 0.5
        %v993 = vmul.f32 %v831, 0.5
        %v994 = vmul.f32 %v833, 0.5
        %v995 = vmul.f32 %v580, 0.5
        %v996 = vmul.f32 %v582, 0.5
        %v997 = vmul.f32 %v837, 0.5
        %v998 = vmul.f32 %v839, 0.5
        %v999 = vmul.f32 %v586, 0.5
        %v1000 = vmul.f32 %v588, 0.5
        %v1001 = vmul.f32 %v843, 0.5
        %v1002 = vmul.f32 %v845, 0.5
        %v1003 = vmul.f32 %v592, 0.5
        %v1004 = vmul.f32 %v594, 0.5
        %v1005 = vmul.f32 %v849, 0.5
        %v1006 = vmul.f32 %v851, 0.5
        %v1007 = vmul.f32 %v598, 0.5
        %v1008 = vmul.f32 %v600, 0.5
        %v1009 = vmul.f32 %v855, 0.5
        %v1010 = vmul.f32 %v857, 0.5
        %v1011 = vmul.f32 %v604, 0.5
        %v1012 = vmul.f32 %v606, 0.5
        %v1013 = vmul.f32 %v861, 0.5
        %v1014 = vmul.f32 %v863, 0.5
        %v1015 = vmul.f32 %v610, 0.5
        %v1016 = vmul.f32 %v612, 0.5
        %v1017 = vmul.f32 %v867, 0.5
        %v1018 = vmul.f32 %v869, 0.5
        %v1019 = vmul.f32 %v616, 0.5
        %v1020 = vmul.f32 %v618, 0.5
        %v1021 = vmul.f32 %v873, 0.5
        %v1022 = vmul.f32 %v875, 0.5
        %v1023 = vmul.f32 %v622, 0.5
        %v1024 = vmul.f32 %v624, 0.5
        %v1025 = vmul.f32 %v879, 0.5
        %v1026 = vmul.f32 %v881, 0.5
        %v1027 = vmul.f32 %v628, 0.5
        %v1028 = vmul.f32 %v630, 0.5
        %v1029 = vmul.f32 %v885, 0.5
        %v1030 = vmul.f32 %v887, 0.5
        %v1031 = vmul.f32 %v634, 0.5
        %v1032 = vmul.f32 %v636, 0.5
        %v1033 = vmul.f32 %v891, 0.5
        %v1034 = vmul.f32 %v893, 0.5
        %v1035 = vmul.f32 %v640, 0.5
        %v1036 = vmul.f32 %v642, 0.5
        %v1037 = vmul.f32 %v897, 0.5
        %v1038 = vmul.f32 %v899, 0.5
        %v1039 = vmul.f32 %v646, 0.5
        %v1040 = vmul.f32 %v648, 0.5
        %v1041 = vmul.f32 %v903, 0.5
        %v1042 = vmul.f32 %v905, 0.5
        %v1043 = vmul.f32 %v652, 0.5
        %v1044 = vmul.f32 %v654, 0.5
        %v1045 = vmul.f32 %v909, 0.5
        %v1046 = vmul.f32 %v911, 0.5
        %v1047 = vmul.f32 %v658, 0.5
        %v1048 = vmul.f32 %v660, 0.5
        %v1049 = vmul.f32 %v915, 0.5
        %v1050 = vmul.f32 %v917, 0.5
        %v1051 = vmul.f32 %v664, 0.5
        %v1052 = vmul.f32 %v666, 0.5
        %v1053 = vmul.f32 %v921, 0.5
        %v1054 = vmul.f32 %v923, 0.5
        %v1055 = vmul.f32 %v670, 0.5
        %v1056 = vmul.f32 %v672, 0.5
        %v1057 = vmul.f32 %v927, 0.5
        %v1058 = vmul.f32 %v929, 0.5
        %v1059 = vmul.f32 %v484, 0.70710677
        %v1060 = vmul.f32 %v486, 0.70710677
        %v1061 = vmul.f32 %v741, 0.70710677
        %v1062 = vmul.f32 %v743, 0.70710677
        %v1063 = vmul.f32 %v490, 0.70710677
        %v1064 = vmul.f32 %v492, 0.70710677
        %v1065 = vmul.f32 %v747, 0.70710677
        %v1066 = vmul.f32 %v749, 0.70710677
        %v1067 = vmul.f32 %v496, 0.70710677
        %v1068 = vmul.f32 %v498, 0.70710677
        %v1069 = vmul.f32 %v753, 0.70710677
        %v1070 = vmul.f32 %v755, 0.70710677
        %v1071 = vmul.f32 %v502, 0.70710677
        %v1072 = vmul.f32 %v504, 0.70710677
        %v1073 = vmul.f32 %v759, 0.70710677
        %v1074 = vmul.f32 %v761, 0.70710677
        %v1075 = vmul.f32 %v508, 0.70710677
        %v1076 = vmul.f32 %v510, 0.70710677
        %v1077 = vmul.f32 %v765, 0.70710677
        %v1078 = vmul.f32 %v767, 0.70710677
        %v1079 = vmul.f32 %v514, 0.70710677
        %v1080 = vmul.f32 %v516, 0.70710677
        %v1081 = vmul.f32 %v771, 0.70710677
        %v1082 = vmul.f32 %v773, 0.70710677
        %v1083 = vmul.f32 %v520, 0.70710677
        %v1084 = vmul.f32 %v522, 0.70710677
        %v1085 = vmul.f32 %v777, 0.70710677
        %v1086 = vmul.f32 %v779, 0.70710677
        %v1087 = vmul.f32 %v526, 0.70710677
        %v1088 = vmul.f32 %v528, 0.70710677
        %v1089 = vmul.f32 %v783, 0.70710677
        %v1090 = vmul.f32 %v785, 0.70710677
        %v1091 = vmul.f32 %v532, 0.70710677
        %v1092 = vmul.f32 %v534, 0.70710677
        %v1093 = vmul.f32 %v789, 0.70710677
        %v1094 = vmul.f32 %v791, 0.70710677
        %v1095 = vmul.f32 %v538, 0.70710677
        %v1096 = vmul.f32 %v540, 0.70710677
        %v1097 = vmul.f32 %v795, 0.70710677
        %v1098 = vmul.f32 %v797, 0.70710677
        %v1099 = vmul.f32 %v544, 0.70710677
        %v1100 = vmul.f32 %v546, 0.70710677
        %v1101 = vmul.f32 %v801, 0.70710677
        %v1102 = vmul.f32 %v803, 0.70710677
        %v1103 = vmul.f32 %v550, 0.70710677
        %v1104 = vmul.f32 %v552, 0.70710677
        %v1105 = vmul.f32 %v807, 0.70710677
        %v1106 = vmul.f32 %v809, 0.70710677
        %v1107 = vmul.f32 %v556, 0.70710677
        %v1108 = vmul.f32 %v558, 0.70710677
        %v1109 = vmul.f32 %v813, 0.70710677
        %v1110 = vmul.f32 %v815, 0.70710677
        %v1111 = vmul.f32 %v562, 0.70710677
        %v1112 = vmul.f32 %v564, 0.70710677
        %v1113 = vmul.f32 %v819, 0.70710677
        %v1114 = vmul.f32 %v821, 0.70710677
        %v1115 = vmul.f32 %v568, 0.70710677
        %v1116 = vmul.f32 %v570, 0.70710677
        %v1117 = vmul.f32 %v825, 0.70710677
        %v1118 = vmul.f32 %v827, 0.70710677
        %v1119 = vmul.f32 %v574, 0.70710677
        %v1120 = vmul.f32 %v576, 0.70710677
        %v1121 = vmul.f32 %v831, 0.70710677
        %v1122 = vmul.f32 %v833, 0.70710677
        %v1123 = vmul.f32 %v580, 0.70710677
        %v1124 = vmul.f32 %v582, 0.70710677
        %v1125 = vmul.f32 %v837, 0.70710677
        %v1126 = vmul.f32 %v839, 0.70710677
        %v1127 = vmul.f32 %v586, 0.70710677
        %v1128 = vmul.f32 %v588, 0.70710677
        %v1129 = vmul.f32 %v843, 0.70710677
        %v1130 = vmul.f32 %v845, 0.70710677
        %v1131 = vmul.f32 %v592, 0.70710677
        %v1132 = vmul.f32 %v594, 0.70710677
        %v1133 = vmul.f32 %v849, 0.70710677
        %v1134 = vmul.f32 %v851, 0.70710677
        %v1135 = vmul.f32 %v598, 0.70710677
        %v1136 = vmul.f32 %v600, 0.70710677
        %v1137 = vmul.f32 %v855, 0.70710677
        %v1138 = vmul.f32 %v857, 0.70710677
        %v1139 = vmul.f32 %v604, 0.70710677
        %v1140 = vmul.f32 %v606, 0.70710677
        %v1141 = vmul.f32 %v861, 0.70710677
        %v1142 = vmul.f32 %v863, 0.70710677
        %v1143 = vmul.f32 %v610, 0.70710677
        %v1144 = vmul.f32 %v612, 0.70710677
        %v1145 = vmul.f32 %v867, 0.70710677
        %v1146 = vmul.f32 %v869, 0.70710677
        %v1147 = vmul.f32 %v616, 0.70710677
        %v1148 = vmul.f32 %v618, 0.70710677
        %v1149 = vmul.f32 %v873, 0.70710677
        %v1150 = vmul.f32 %v875, 0.70710677
        %v1151 = vmul.f32 %v622, 0.70710677
        %v1152 = vmul.f32 %v624, 0.70710677
        %v1153 = vmul.f32 %v879, 0.70710677
        %v1154 = vmul.f32 %v881, 0.70710677
        %v1155 = vmul.f32 %v628, 0.70710677
        %v1156 = vmul.f32 %v630, 0.70710677
        %v1157 = vmul.f32 %v885, 0.70710677
        %v1158 = vmul.f32 %v887, 0.70710677
        %v1159 = vmul.f32 %v634, 0.70710677
        %v1160 = vmul.f32 %v636, 0.70710677
        %v1161 = vmul.f32 %v891, 0.70710677
        %v1162 = vmul.f32 %v893, 0.70710677
        %v1163 = vmul.f32 %v640, 0.70710677
        %v1164 = vmul.f32 %v642, 0.70710677
        %v1165 = vmul.f32 %v897, 0.70710677
        %v1166 = vmul.f32 %v899, 0.70710677
        %v1167 = vmul.f32 %v646, 0.70710677
        %v1168 = vmul.f32 %v648, 0.70710677
        %v1169 = vmul.f32 %v903, 0.70710677
        %v1170 = vmul.f32 %v905, 0.70710677
        %v1171 = vmul.f32 %v652, 0.70710677
        %v1172 = vmul.f32 %v654, 0.70710677
        %v1173 = vmul.f32 %v909, 0.70710677
        %v1174 = vmul.f32 %v911, 0.70710677
        %v1175 = vmul.f32 %v658, 0.70710677
        %v1176 = vmul.f32 %v660, 0.70710677
        %v1177 = vmul.f32 %v915, 0.70710677
        %v1178 = vmul.f32 %v917, 0.70710677
        %v1179 = vmul.f32 %v664, 0.70710677
        %v1180 = vmul.f32 %v666, 0.70710677
        %v1181 = vmul.f32 %v921, 0.70710677
        %v1182 = vmul.f32 %v923, 0.70710677
        %v1183 = vmul.f32 %v670, 0.70710677
        %v1184 = vmul.f32 %v672, 0.70710677
        %v1185 = vmul.f32 %v927, 0.70710677
        %v1186 = vmul.f32 %v929, 0.70710677
        %v1187 = verf.f32.pop %v1059
        %v1188 = verf.f32.pop %v1060
        %v1189 = verf.f32.pop %v1061
        %v1190 = verf.f32.pop %v1062
        %v1191 = verf.f32.pop %v1063
        %v1192 = verf.f32.pop %v1064
        %v1193 = verf.f32.pop %v1065
        %v1194 = verf.f32.pop %v1066
        %v1195 = verf.f32.pop %v1067
        %v1196 = verf.f32.pop %v1068
        %v1197 = verf.f32.pop %v1069
        %v1198 = verf.f32.pop %v1070
        %v1199 = verf.f32.pop %v1071
        %v1200 = verf.f32.pop %v1072
        %v1201 = verf.f32.pop %v1073
        %v1202 = verf.f32.pop %v1074
        %v1203 = verf.f32.pop %v1075
        %v1204 = verf.f32.pop %v1076
        %v1205 = verf.f32.pop %v1077
        %v1206 = verf.f32.pop %v1078
        %v1207 = verf.f32.pop %v1079
        %v1208 = verf.f32.pop %v1080
        %v1209 = verf.f32.pop %v1081
        %v1210 = verf.f32.pop %v1082
        %v1211 = verf.f32.pop %v1083
        %v1212 = verf.f32.pop %v1084
        %v1213 = verf.f32.pop %v1085
        %v1214 = verf.f32.pop %v1086
        %v1215 = verf.f32.pop %v1087
        %v1216 = verf.f32.pop %v1088
        %v1217 = verf.f32.pop %v1089
        %v1218 = verf.f32.pop %v1090
        %v1219 = verf.f32.pop %v1091
        %v1220 = verf.f32.pop %v1092
        %v1221 = verf.f32.pop %v1093
        %v1222 = verf.f32.pop %v1094
        %v1223 = verf.f32.pop %v1095
        %v1224 = verf.f32.pop %v1096
        %v1225 = verf.f32.pop %v1097
        %v1226 = verf.f32.pop %v1098
        %v1227 = verf.f32.pop %v1099
        %v1228 = verf.f32.pop %v1100
        %v1229 = verf.f32.pop %v1101
        %v1230 = verf.f32.pop %v1102
        %v1231 = verf.f32.pop %v1103
        %v1232 = verf.f32.pop %v1104
        %v1233 = verf.f32.pop %v1105
        %v1234 = verf.f32.pop %v1106
        %v1235 = verf.f32.pop %v1107
        %v1236 = verf.f32.pop %v1108
        %v1237 = verf.f32.pop %v1109
        %v1238 = verf.f32.pop %v1110
        %v1239 = verf.f32.pop %v1111
        %v1240 = verf.f32.pop %v1112
        %v1241 = verf.f32.pop %v1113
        %v1242 = verf.f32.pop %v1114
        %v1243 = verf.f32.pop %v1115
        %v1244 = verf.f32.pop %v1116
        %v1245 = verf.f32.pop %v1117
        %v1246 = verf.f32.pop %v1118
        %v1247 = verf.f32.pop %v1119
        %v1248 = verf.f32.pop %v1120
        %v1249 = verf.f32.pop %v1121
        %v1250 = verf.f32.pop %v1122
        %v1251 = verf.f32.pop %v1123
        %v1252 = verf.f32.pop %v1124
        %v1253 = verf.f32.pop %v1125
        %v1254 = verf.f32.pop %v1126
        %v1255 = verf.f32.pop %v1127
        %v1256 = verf.f32.pop %v1128
        %v1257 = verf.f32.pop %v1129
        %v1258 = verf.f32.pop %v1130
        %v1259 = verf.f32.pop %v1131
        %v1260 = verf.f32.pop %v1132
        %v1261 = verf.f32.pop %v1133
        %v1262 = verf.f32.pop %v1134
        %v1263 = verf.f32.pop %v1135
        %v1264 = verf.f32.pop %v1136
        %v1265 = verf.f32.pop %v1137
        %v1266 = verf.f32.pop %v1138
        %v1267 = verf.f32.pop %v1139
        %v1268 = verf.f32.pop %v1140
        %v1269 = verf.f32.pop %v1141
        %v1270 = verf.f32.pop %v1142
        %v1271 = verf.f32.pop %v1143
        %v1272 = verf.f32.pop %v1144
        %v1273 = verf.f32.pop %v1145
        %v1274 = verf.f32.pop %v1146
        %v1275 = verf.f32.pop %v1147
        %v1276 = verf.f32.pop %v1148
        %v1277 = verf.f32.pop %v1149
        %v1278 = verf.f32.pop %v1150
        %v1279 = verf.f32.pop %v1151
        %v1280 = verf.f32.pop %v1152
        %v1281 = verf.f32.pop %v1153
        %v1282 = verf.f32.pop %v1154
        %v1283 = verf.f32.pop %v1155
        %v1284 = verf.f32.pop %v1156
        %v1285 = verf.f32.pop %v1157
        %v1286 = verf.f32.pop %v1158
        %v1287 = verf.f32.pop %v1159
        %v1288 = verf.f32.pop %v1160
        %v1289 = verf.f32.pop %v1161
        %v1290 = verf.f32.pop %v1162
        %v1291 = verf.f32.pop %v1163
        %v1292 = verf.f32.pop %v1164
        %v1293 = verf.f32.pop %v1165
        %v1294 = verf.f32.pop %v1166
        %v1295 = verf.f32.pop %v1167
        %v1296 = verf.f32.pop %v1168
        %v1297 = verf.f32.pop %v1169
        %v1298 = verf.f32.pop %v1170
        %v1299 = verf.f32.pop %v1171
        %v1300 = verf.f32.pop %v1172
        %v1301 = verf.f32.pop %v1173
        %v1302 = verf.f32.pop %v1174
        %v1303 = verf.f32.pop %v1175
        %v1304 = verf.f32.pop %v1176
        %v1305 = verf.f32.pop %v1177
        %v1306 = verf.f32.pop %v1178
        %v1307 = verf.f32.pop %v1179
        %v1308 = verf.f32.pop %v1180
        %v1309 = verf.f32.pop %v1181
        %v1310 = verf.f32.pop %v1182
        %v1311 = verf.f32.pop %v1183
        %v1312 = verf.f32.pop %v1184
        %v1313 = verf.f32.pop %v1185
        %v1314 = verf.f32.pop %v1186
        %v1315 = vadd.f32 %v1187, 1.0
        %v1316 = vadd.f32 %v1188, 1.0
        %v1317 = vadd.f32 %v1189, 1.0
        %v1318 = vadd.f32 %v1190, 1.0
        %v1319 = vadd.f32 %v1191, 1.0
        %v1320 = vadd.f32 %v1192, 1.0
        %v1321 = vadd.f32 %v1193, 1.0
        %v1322 = vadd.f32 %v1194, 1.0
        %v1323 = vadd.f32 %v1195, 1.0
        %v1324 = vadd.f32 %v1196, 1.0
        %v1325 = vadd.f32 %v1197, 1.0
        %v1326 = vadd.f32 %v1198, 1.0
        %v1327 = vadd.f32 %v1199, 1.0
        %v1328 = vadd.f32 %v1200, 1.0
        %v1329 = vadd.f32 %v1201, 1.0
        %v1330 = vadd.f32 %v1202, 1.0
        %v1331 = vadd.f32 %v1203, 1.0
        %v1332 = vadd.f32 %v1204, 1.0
        %v1333 = vadd.f32 %v1205, 1.0
        %v1334 = vadd.f32 %v1206, 1.0
        %v1335 = vadd.f32 %v1207, 1.0
        %v1336 = vadd.f32 %v1208, 1.0
        %v1337 = vadd.f32 %v1209, 1.0
        %v1338 = vadd.f32 %v1210, 1.0
        %v1339 = vadd.f32 %v1211, 1.0
        %v1340 = vadd.f32 %v1212, 1.0
        %v1341 = vadd.f32 %v1213, 1.0
        %v1342 = vadd.f32 %v1214, 1.0
        %v1343 = vadd.f32 %v1215, 1.0
        %v1344 = vadd.f32 %v1216, 1.0
        %v1345 = vadd.f32 %v1217, 1.0
        %v1346 = vadd.f32 %v1218, 1.0
        %v1347 = vadd.f32 %v1219, 1.0
        %v1348 = vadd.f32 %v1220, 1.0
        %v1349 = vadd.f32 %v1221, 1.0
        %v1350 = vadd.f32 %v1222, 1.0
        %v1351 = vadd.f32 %v1223, 1.0
        %v1352 = vadd.f32 %v1224, 1.0
        %v1353 = vadd.f32 %v1225, 1.0
        %v1354 = vadd.f32 %v1226, 1.0
        %v1355 = vadd.f32 %v1227, 1.0
        %v1356 = vadd.f32 %v1228, 1.0
        %v1357 = vadd.f32 %v1229, 1.0
        %v1358 = vadd.f32 %v1230, 1.0
        %v1359 = vadd.f32 %v1231, 1.0
        %v1360 = vadd.f32 %v1232, 1.0
        %v1361 = vadd.f32 %v1233, 1.0
        %v1362 = vadd.f32 %v1234, 1.0
        %v1363 = vadd.f32 %v1235, 1.0
        %v1364 = vadd.f32 %v1236, 1.0
        %v1365 = vadd.f32 %v1237, 1.0
        %v1366 = vadd.f32 %v1238, 1.0
        %v1367 = vadd.f32 %v1239, 1.0
        %v1368 = vadd.f32 %v1240, 1.0
        %v1369 = vadd.f32 %v1241, 1.0
        %v1370 = vadd.f32 %v1242, 1.0
        %v1371 = vadd.f32 %v1243, 1.0
        %v1372 = vadd.f32 %v1244, 1.0
        %v1373 = vadd.f32 %v1245, 1.0
        %v1374 = vadd.f32 %v1246, 1.0
        %v1375 = vadd.f32 %v1247, 1.0
        %v1376 = vadd.f32 %v1248, 1.0
        %v1377 = vadd.f32 %v1249, 1.0
        %v1378 = vadd.f32 %v1250, 1.0
        %v1379 = vadd.f32 %v1251, 1.0
        %v1380 = vadd.f32 %v1252, 1.0
        %v1381 = vadd.f32 %v1253, 1.0
        %v1382 = vadd.f32 %v1254, 1.0
        %v1383 = vadd.f32 %v1255, 1.0
        %v1384 = vadd.f32 %v1256, 1.0
        %v1385 = vadd.f32 %v1257, 1.0
        %v1386 = vadd.f32 %v1258, 1.0
        %v1387 = vadd.f32 %v1259, 1.0
        %v1388 = vadd.f32 %v1260, 1.0
        %v1389 = vadd.f32 %v1261, 1.0
        %v1390 = vadd.f32 %v1262, 1.0
        %v1391 = vadd.f32 %v1263, 1.0
        %v1392 = vadd.f32 %v1264, 1.0
        %v1393 = vadd.f32 %v1265, 1.0
        %v1394 = vadd.f32 %v1266, 1.0
        %v1395 = vadd.f32 %v1267, 1.0
        %v1396 = vadd.f32 %v1268, 1.0
        %v1397 = vadd.f32 %v1269, 1.0
        %v1398 = vadd.f32 %v1270, 1.0
        %v1399 = vadd.f32 %v1271, 1.0
        %v1400 = vadd.f32 %v1272, 1.0
        %v1401 = vadd.f32 %v1273, 1.0
        %v1402 = vadd.f32 %v1274, 1.0
        %v1403 = vadd.f32 %v1275, 1.0
        %v1404 = vadd.f32 %v1276, 1.0
        %v1405 = vadd.f32 %v1277, 1.0
        %v1406 = vadd.f32 %v1278, 1.0
        %v1407 = vadd.f32 %v1279, 1.0
        %v1408 = vadd.f32 %v1280, 1.0
        %v1409 = vadd.f32 %v1281, 1.0
        %v1410 = vadd.f32 %v1282, 1.0
        %v1411 = vadd.f32 %v1283, 1.0
        %v1412 = vadd.f32 %v1284, 1.0
        %v1413 = vadd.f32 %v1285, 1.0
        %v1414 = vadd.f32 %v1286, 1.0
        %v1415 = vadd.f32 %v1287, 1.0
        %v1416 = vadd.f32 %v1288, 1.0
        %v1417 = vadd.f32 %v1289, 1.0
        %v1418 = vadd.f32 %v1290, 1.0
        %v1419 = vadd.f32 %v1291, 1.0
        %v1420 = vadd.f32 %v1292, 1.0
        %v1421 = vadd.f32 %v1293, 1.0
        %v1422 = vadd.f32 %v1294, 1.0
        %v1423 = vadd.f32 %v1295, 1.0
        %v1424 = vadd.f32 %v1296, 1.0
        %v1425 = vadd.f32 %v1297, 1.0
        %v1426 = vadd.f32 %v1298, 1.0
        %v1427 = vadd.f32 %v1299, 1.0
        %v1428 = vadd.f32 %v1300, 1.0
        %v1429 = vadd.f32 %v1301, 1.0
        %v1430 = vadd.f32 %v1302, 1.0
        %v1431 = vadd.f32 %v1303, 1.0
        %v1432 = vadd.f32 %v1304, 1.0
        %v1433 = vadd.f32 %v1305, 1.0
        %v1434 = vadd.f32 %v1306, 1.0
        %v1435 = vadd.f32 %v1307, 1.0
        %v1436 = vadd.f32 %v1308, 1.0
        %v1437 = vadd.f32 %v1309, 1.0
        %v1438 = vadd.f32 %v1310, 1.0
        %v1439 = vadd.f32 %v1311, 1.0
        %v1440 = vadd.f32 %v1312, 1.0
        %v1441 = vadd.f32 %v1313, 1.0
        %v1442 = vadd.f32 %v1314, 1.0
        %v1443 = vmul.f32 %v931, %v1315
        %v1444 = vmul.f32 %v932, %v1316
        %v1445 = vmul.f32 %v933, %v1317
        %v1446 = vmul.f32 %v934, %v1318
        %v1447 = vmul.f32 %v935, %v1319
        %v1448 = vmul.f32 %v936, %v1320
        %v1449 = vmul.f32 %v937, %v1321
        %v1450 = vmul.f32 %v938, %v1322
        %v1451 = vmul.f32 %v939, %v1323
        %v1452 = vmul.f32 %v940, %v1324
        %v1453 = vmul.f32 %v941, %v1325
        %v1454 = vmul.f32 %v942, %v1326
        %v1455 = vmul.f32 %v943, %v1327
        %v1456 = vmul.f32 %v944, %v1328
        %v1457 = vmul.f32 %v945, %v1329
        %v1458 = vmul.f32 %v946, %v1330
        %v1459 = vmul.f32 %v947, %v1331
        %v1460 = vmul.f32 %v948, %v1332
        %v1461 = vmul.f32 %v949, %v1333
        %v1462 = vmul.f32 %v950, %v1334
        %v1463 = vmul.f32 %v951, %v1335
        %v1464 = vmul.f32 %v952, %v1336
        %v1465 = vmul.f32 %v953, %v1337
        %v1466 = vmul.f32 %v954, %v1338
        %v1467 = vmul.f32 %v955, %v1339
        %v1468 = vmul.f32 %v956, %v1340
        %v1469 = vmul.f32 %v957, %v1341
        %v1470 = vmul.f32 %v958, %v1342
        %v1471 = vmul.f32 %v959, %v1343
        %v1472 = vmul.f32 %v960, %v1344
        %v1473 = vmul.f32 %v961, %v1345
        %v1474 = vmul.f32 %v962, %v1346
        %v1475 = vmul.f32 %v963, %v1347
        %v1476 = vmul.f32 %v964, %v1348
        %v1477 = vmul.f32 %v965, %v1349
        %v1478 = vmul.f32 %v966, %v1350
        %v1479 = vmul.f32 %v967, %v1351
        %v1480 = vmul.f32 %v968, %v1352
        %v1481 = vmul.f32 %v969, %v1353
        %v1482 = vmul.f32 %v970, %v1354
        %v1483 = vmul.f32 %v971, %v1355
        %v1484 = vmul.f32 %v972, %v1356
        %v1485 = vmul.f32 %v973, %v1357
        %v1486 = vmul.f32 %v974, %v1358
        %v1487 = vmul.f32 %v975, %v1359
        %v1488 = vmul.f32 %v976, %v1360
        %v1489 = vmul.f32 %v977, %v1361
        %v1490 = vmul.f32 %v978, %v1362
        %v1491 = vmul.f32 %v979, %v1363
        %v1492 = vmul.f32 %v980, %v1364
        %v1493 = vmul.f32 %v981, %v1365
        %v1494 = vmul.f32 %v982, %v1366
        %v1495 = vmul.f32 %v983, %v1367
        %v1496 = vmul.f32 %v984, %v1368
        %v1497 = vmul.f32 %v985, %v1369
        %v1498 = vmul.f32 %v986, %v1370
        %v1499 = vmul.f32 %v987, %v1371
        %v1500 = vmul.f32 %v988, %v1372
        %v1501 = vmul.f32 %v989, %v1373
        %v1502 = vmul.f32 %v990, %v1374
        %v1503 = vmul.f32 %v991, %v1375
        %v1504 = vmul.f32 %v992, %v1376
        %v1505 = vmul.f32 %v993, %v1377
        %v1506 = vmul.f32 %v994, %v1378
        %v1507 = vmul.f32 %v995, %v1379
        %v1508 = vmul.f32 %v996, %v1380
        %v1509 = vmul.f32 %v997, %v1381
        %v1510 = vmul.f32 %v998, %v1382
        %v1511 = vmul.f32 %v999, %v1383
        %v1512 = vmul.f32 %v1000, %v1384
        %v1513 = vmul.f32 %v1001, %v1385
        %v1514 = vmul.f32 %v1002, %v1386
        %v1515 = vmul.f32 %v1003, %v1387
        %v1516 = vmul.f32 %v1004, %v1388
        %v1517 = vmul.f32 %v1005, %v1389
        %v1518 = vmul.f32 %v1006, %v1390
        %v1519 = vmul.f32 %v1007, %v1391
        %v1520 = vmul.f32 %v1008, %v1392
        %v1521 = vmul.f32 %v1009, %v1393
        %v1522 = vmul.f32 %v1010, %v1394
        %v1523 = vmul.f32 %v1011, %v1395
        %v1524 = vmul.f32 %v1012, %v1396
        %v1525 = vmul.f32 %v1013, %v1397
        %v1526 = vmul.f32 %v1014, %v1398
        %v1527 = vmul.f32 %v1015, %v1399
        %v1528 = vmul.f32 %v1016, %v1400
        %v1529 = vmul.f32 %v1017, %v1401
        %v1530 = vmul.f32 %v1018, %v1402
        %v1531 = vmul.f32 %v1019, %v1403
        %v1532 = vmul.f32 %v1020, %v1404
        %v1533 = vmul.f32 %v1021, %v1405
        %v1534 = vmul.f32 %v1022, %v1406
        %v1535 = vmul.f32 %v1023, %v1407
        %v1536 = vmul.f32 %v1024, %v1408
        %v1537 = vmul.f32 %v1025, %v1409
        %v1538 = vmul.f32 %v1026, %v1410
        %v1539 = vmul.f32 %v1027, %v1411
        %v1540 = vmul.f32 %v1028, %v1412
        %v1541 = vmul.f32 %v1029, %v1413
        %v1542 = vmul.f32 %v1030, %v1414
        %v1543 = vmul.f32 %v1031, %v1415
        %v1544 = vmul.f32 %v1032, %v1416
        %v1545 = vmul.f32 %v1033, %v1417
        %v1546 = vmul.f32 %v1034, %v1418
        %v1547 = vmul.f32 %v1035, %v1419
        %v1548 = vmul.f32 %v1036, %v1420
        %v1549 = vmul.f32 %v1037, %v1421
        %v1550 = vmul.f32 %v1038, %v1422
        %v1551 = vmul.f32 %v1039, %v1423
        %v1552 = vmul.f32 %v1040, %v1424
        %v1553 = vmul.f32 %v1041, %v1425
        %v1554 = vmul.f32 %v1042, %v1426
        %v1555 = vmul.f32 %v1043, %v1427
        %v1556 = vmul.f32 %v1044, %v1428
        %v1557 = vmul.f32 %v1045, %v1429
        %v1558 = vmul.f32 %v1046, %v1430
        %v1559 = vmul.f32 %v1047, %v1431
        %v1560 = vmul.f32 %v1048, %v1432
        %v1561 = vmul.f32 %v1049, %v1433
        %v1562 = vmul.f32 %v1050, %v1434
        %v1563 = vmul.f32 %v1051, %v1435
        %v1564 = vmul.f32 %v1052, %v1436
        %v1565 = vmul.f32 %v1053, %v1437
        %v1566 = vmul.f32 %v1054, %v1438
        %v1567 = vmul.f32 %v1055, %v1439
        %v1568 = vmul.f32 %v1056, %v1440
        %v1569 = vmul.f32 %v1057, %v1441
        %v1570 = vmul.f32 %v1058, %v1442
        %v1571 = vld [vmem:[#allocation8] sm:$0xff]
        %v1572 = vld [vmem:[#allocation8 + $0x8] sm:$0xff]
        %v1573 = vld [vmem:[#allocation8 + $0x10] sm:$0xff]
        %v1574 = vld [vmem:[#allocation8 + $0x18] sm:$0xff]
        %v1575 = vld [vmem:[#allocation8 + $0x20] sm:$0xff]
        %v1576 = vld [vmem:[#allocation8 + $0x28] sm:$0xff]
        %v1577 = vld [vmem:[#allocation8 + $0x30] sm:$0xff]
        %v1578 = vld [vmem:[#allocation8 + $0x38] sm:$0xff]
        %v1579 = vld [vmem:[#allocation8 + $0x40] sm:$0xff]
        %v1580 = vld [vmem:[#allocation8 + $0x48] sm:$0xff]
        %v1581 = vld [vmem:[#allocation8 + $0x50] sm:$0xff]
        %v1582 = vld [vmem:[#allocation8 + $0x58] sm:$0xff]
        %v1583 = vld [vmem:[#allocation8 + $0x60] sm:$0xff]
        %v1584 = vld [vmem:[#allocation8 + $0x68] sm:$0xff]
        %v1585 = vld [vmem:[#allocation8 + $0x70] sm:$0xff]
        %v1586 = vld [vmem:[#allocation8 + $0x78] sm:$0xff]
        %v1587 = vld [vmem:[#allocation8 + $0x80] sm:$0xff]
        %v1588 = vld [vmem:[#allocation8 + $0x88] sm:$0xff]
        %v1589 = vld [vmem:[#allocation8 + $0x90] sm:$0xff]
        %v1590 = vld [vmem:[#allocation8 + $0x98] sm:$0xff]
        %v1591 = vld [vmem:[#allocation8 + $0xa0] sm:$0xff]
        %v1592 = vld [vmem:[#allocation8 + $0xa8] sm:$0xff]
        %v1593 = vld [vmem:[#allocation8 + $0xb0] sm:$0xff]
        %v1594 = vld [vmem:[#allocation8 + $0xb8] sm:$0xff]
        %v1595 = vld [vmem:[#allocation8 + $0xc0] sm:$0xff]
        %v1596 = vld [vmem:[#allocation8 + $0xc8] sm:$0xff]
        %v1597 = vld [vmem:[#allocation8 + $0xd0] sm:$0xff]
        %v1598 = vld [vmem:[#allocation8 + $0xd8] sm:$0xff]
        %v1599 = vld [vmem:[#allocation8 + $0xe0] sm:$0xff]
        %v1600 = vld [vmem:[#allocation8 + $0xe8] sm:$0xff]
        %v1601 = vld [vmem:[#allocation8 + $0xf0] sm:$0xff]
        %v1602 = vld [vmem:[#allocation8 + $0xf8] sm:$0xff]
        %v1603 = vld [vmem:[#allocation8 + $0x100] sm:$0xff]
        %v1604 = vld [vmem:[#allocation8 + $0x108] sm:$0xff]
        %v1605 = vld [vmem:[#allocation8 + $0x110] sm:$0xff]
        %v1606 = vld [vmem:[#allocation8 + $0x118] sm:$0xff]
        %v1607 = vld [vmem:[#allocation8 + $0x120] sm:$0xff]
        %v1608 = vld [vmem:[#allocation8 + $0x128] sm:$0xff]
        %v1609 = vld [vmem:[#allocation8 + $0x130] sm:$0xff]
        %v1610 = vld [vmem:[#allocation8 + $0x138] sm:$0xff]
        %v1611 = vld [vmem:[#allocation8 + $0x140] sm:$0xff]
        %v1612 = vld [vmem:[#allocation8 + $0x148] sm:$0xff]
        %v1613 = vld [vmem:[#allocation8 + $0x150] sm:$0xff]
        %v1614 = vld [vmem:[#allocation8 + $0x158] sm:$0xff]
        %v1615 = vld [vmem:[#allocation8 + $0x160] sm:$0xff]
        %v1616 = vld [vmem:[#allocation8 + $0x168] sm:$0xff]
        %v1617 = vld [vmem:[#allocation8 + $0x170] sm:$0xff]
        %v1618 = vld [vmem:[#allocation8 + $0x178] sm:$0xff]
        %v1619 = vld [vmem:[#allocation8 + $0x180] sm:$0xff]
        %v1620 = vld [vmem:[#allocation8 + $0x188] sm:$0xff]
        %v1621 = vld [vmem:[#allocation8 + $0x190] sm:$0xff]
        %v1622 = vld [vmem:[#allocation8 + $0x198] sm:$0xff]
        %v1623 = vld [vmem:[#allocation8 + $0x1a0] sm:$0xff]
        %v1624 = vld [vmem:[#allocation8 + $0x1a8] sm:$0xff]
        %v1625 = vld [vmem:[#allocation8 + $0x1b0] sm:$0xff]
        %v1626 = vld [vmem:[#allocation8 + $0x1b8] sm:$0xff]
        %v1627 = vld [vmem:[#allocation8 + $0x1c0] sm:$0xff]
        %v1628 = vld [vmem:[#allocation8 + $0x1c8] sm:$0xff]
        %v1629 = vld [vmem:[#allocation8 + $0x1d0] sm:$0xff]
        %v1630 = vld [vmem:[#allocation8 + $0x1d8] sm:$0xff]
        %v1631 = vld [vmem:[#allocation8 + $0x1e0] sm:$0xff]
        %v1632 = vld [vmem:[#allocation8 + $0x1e8] sm:$0xff]
        %v1633 = vld [vmem:[#allocation8 + $0x1f0] sm:$0xff]
        %v1634 = vld [vmem:[#allocation8 + $0x1f8] sm:$0xff]
        %v1635 = vld [vmem:[#allocation10] sm:$0x1]
        %v1637 = vlaneseq
        %v1638 = vshrl.u32 %v1637, 7
        %v1639 = vsub.s32 0, %v1638
        %v1640 = vrot.slane %v1635, %v1639
        %1642 = vmatprep.subr.mxu0 0.0
        %1643 = vmatpush1.msra.mxu0 %v1571
        %1644 = vmatprep.subr.mxu0 0.0
        %1645 = vmatpush1.msra.mxu0 %v1572
        %1646 = vmatprep.subr.mxu0 0.0
        %1647 = vmatpush1.msra.mxu0 %v1573
        %1648 = vmatprep.subr.mxu0 0.0
        %1649 = vmatpush1.msra.mxu0 %v1574
        %1650 = vmatprep.subr.mxu0 0.0
        %1651 = vmatpush1.msra.mxu0 %v1575
        %1652 = vmatprep.subr.mxu0 0.0
        %1653 = vmatpush1.msra.mxu0 %v1576
        %1654 = vmatprep.subr.mxu0 0.0
        %1655 = vmatpush1.msra.mxu0 %v1577
        %1656 = vmatprep.subr.mxu0 0.0
        %1657 = vmatpush1.msra.mxu0 %v1578
        %1658 = vmatprep.subr.mxu0 0.0
        %1659 = vmatpush1.msra.mxu0 %v1579
        %1660 = vmatprep.subr.mxu0 0.0
        %1661 = vmatpush1.msra.mxu0 %v1580
        %1662 = vmatprep.subr.mxu0 0.0
        %1663 = vmatpush1.msra.mxu0 %v1581
        %1664 = vmatprep.subr.mxu0 0.0
        %1665 = vmatpush1.msra.mxu0 %v1582
        %1666 = vmatprep.subr.mxu0 0.0
        %1667 = vmatpush1.msra.mxu0 %v1583
        %1668 = vmatprep.subr.mxu0 0.0
        %1669 = vmatpush1.msra.mxu0 %v1584
        %1670 = vmatprep.subr.mxu0 0.0
        %1671 = vmatpush1.msra.mxu0 %v1585
        %1672 = vmatprep.subr.mxu0 0.0
        %1673 = vmatpush1.msra.mxu0 %v1586
        %1674 = vmatprep.subr.mxu0 0.0
        %1675 = vmatpush1.msra.mxu0 %v1587
        %1676 = vmatprep.subr.mxu0 0.0
        %1677 = vmatpush1.msra.mxu0 %v1588
        %1678 = vmatprep.subr.mxu0 0.0
        %1679 = vmatpush1.msra.mxu0 %v1589
        %1680 = vmatprep.subr.mxu0 0.0
        %1681 = vmatpush1.msra.mxu0 %v1590
        %1682 = vmatprep.subr.mxu0 0.0
        %1683 = vmatpush1.msra.mxu0 %v1591
        %1684 = vmatprep.subr.mxu0 0.0
        %1685 = vmatpush1.msra.mxu0 %v1592
        %1686 = vmatprep.subr.mxu0 0.0
        %1687 = vmatpush1.msra.mxu0 %v1593
        %1688 = vmatprep.subr.mxu0 0.0
        %1689 = vmatpush1.msra.mxu0 %v1594
        %1690 = vmatprep.subr.mxu0 0.0
        %1691 = vmatpush1.msra.mxu0 %v1595
        %1692 = vmatprep.subr.mxu0 0.0
        %1693 = vmatpush1.msra.mxu0 %v1596
        %1694 = vmatprep.subr.mxu0 0.0
        %1695 = vmatpush1.msra.mxu0 %v1597
        %1696 = vmatprep.subr.mxu0 0.0
        %1697 = vmatpush1.msra.mxu0 %v1598
        %1698 = vmatprep.subr.mxu0 0.0
        %1699 = vmatpush1.msra.mxu0 %v1599
        %1700 = vmatprep.subr.mxu0 0.0
        %1701 = vmatpush1.msra.mxu0 %v1600
        %1702 = vmatprep.subr.mxu0 0.0
        %1703 = vmatpush1.msra.mxu0 %v1601
        %1704 = vmatprep.subr.mxu0 0.0
        %1705 = vmatpush1.msra.mxu0 %v1602
        %1706 = vmatprep.mubr.f32.mxu0 %v1444
        %1707 = vmatmul.mubr.f32.gmra.mrb[0].mxu0 %v1443
        %v1708 = vpop.f32.mrb[0].mxu0
        %v1709 = vadd.f32 %v1640, %v1708
        %v1710 = vpop.f32.mrb[0].mxu0
        %1711 = vmatprep.mubr.f32.mxu0 %v1448
        %1712 = vmatmul.mubr.f32.gmra.mrb[0].mxu0 %v1447
        %v1713 = vpop.f32.mrb[0].mxu0
        %v1714 = vadd.f32 %v1640, %v1713
        %v1715 = vpop.f32.mrb[0].mxu0
        %1716 = vmatprep.mubr.f32.mxu0 %v1452
        %1717 = vmatmul.mubr.f32.gmra.mrb[0].mxu0 %v1451
        %v1718 = vpop.f32.mrb[0].mxu0
        %v1719 = vadd.f32 %v1640, %v1718
        %v1720 = vpop.f32.mrb[0].mxu0
        %1721 = vmatprep.mubr.f32.mxu0 %v1456
        %1722 = vmatmul.mubr.f32.gmra.mrb[0].mxu0 %v1455
        %v1723 = vpop.f32.mrb[0].mxu0
        %v1724 = vadd.f32 %v1640, %v1723
        %v1725 = vpop.f32.mrb[0].mxu0
        %1726 = vmatprep.mubr.f32.mxu0 %v1460
        %1727 = vmatmul.mubr.f32.gmra.mrb[0].mxu0 %v1459
        %v1728 = vpop.f32.mrb[0].mxu0
        %v1729 = vadd.f32 %v1640, %v1728
        %v1730 = vpop.f32.mrb[0].mxu0
        %1731 = vmatprep.mubr.f32.mxu0 %v1464
        %1732 = vmatmul.mubr.f32.gmra.mrb[0].mxu0 %v1463
        %v1733 = vpop.f32.mrb[0].mxu0
        %v1734 = vadd.f32 %v1640, %v1733
        %v1735 = vpop.f32.mrb[0].mxu0
        %1736 = vmatprep.mubr.f32.mxu0 %v1468
        %1737 = vmatmul.mubr.f32.gmra.mrb[0].mxu0 %v1467
        %v1738 = vpop.f32.mrb[0].mxu0
        %v1739 = vadd.f32 %v1640, %v1738
        %v1740 = vpop.f32.mrb[0].mxu0
        %1741 = vmatprep.mubr.f32.mxu0 %v1472
        %1742 = vmatmul.mubr.f32.gmra.mrb[0].mxu0 %v1471
        %v1743 = vpop.f32.mrb[0].mxu0
        %v1744 = vadd.f32 %v1640, %v1743
        %v1745 = vpop.f32.mrb[0].mxu0
        %1746 = vmatprep.mubr.f32.mxu0 %v1476
        %1747 = vmatmul.mubr.f32.gmra.mrb[0].mxu0 %v1475
        %v1748 = vpop.f32.mrb[0].mxu0
        %v1749 = vadd.f32 %v1640, %v1748
        %v1750 = vpop.f32.mrb[0].mxu0
        %1751 = vmatprep.mubr.f32.mxu0 %v1480
        %1752 = vmatmul.mubr.f32.gmra.mrb[0].mxu0 %v1479
        %v1753 = vpop.f32.mrb[0].mxu0
        %v1754 = vadd.f32 %v1640, %v1753
        %v1755 = vpop.f32.mrb[0].mxu0
        %1756 = vmatprep.mubr.f32.mxu0 %v1484
        %1757 = vmatmul.mubr.f32.gmra.mrb[0].mxu0 %v1483
        %v1758 = vpop.f32.mrb[0].mxu0
        %v1759 = vadd.f32 %v1640, %v1758
        %v1760 = vpop.f32.mrb[0].mxu0
        %1761 = vmatprep.mubr.f32.mxu0 %v1488
        %1762 = vmatmul.mubr.f32.gmra.mrb[0].mxu0 %v1487
        %v1763 = vpop.f32.mrb[0].mxu0
        %v1764 = vadd.f32 %v1640, %v1763
        %v1765 = vpop.f32.mrb[0].mxu0
        %1766 = vmatprep.mubr.f32.mxu0 %v1492
        %1767 = vmatmul.mubr.f32.gmra.mrb[0].mxu0 %v1491
        %v1768 = vpop.f32.mrb[0].mxu0
        %v1769 = vadd.f32 %v1640, %v1768
        %v1770 = vpop.f32.mrb[0].mxu0
        %1771 = vmatprep.mubr.f32.mxu0 %v1496
        %1772 = vmatmul.mubr.f32.gmra.mrb[0].mxu0 %v1495
        %v1773 = vpop.f32.mrb[0].mxu0
        %v1774 = vadd.f32 %v1640, %v1773
        %v1775 = vpop.f32.mrb[0].mxu0
        %1776 = vmatprep.mubr.f32.mxu0 %v1500
        %1777 = vmatmul.mubr.f32.gmra.mrb[0].mxu0 %v1499
        %v1778 = vpop.f32.mrb[0].mxu0
        %v1779 = vadd.f32 %v1640, %v1778
        %v1780 = vpop.f32.mrb[0].mxu0
        %1781 = vmatprep.mubr.f32.mxu0 %v1504
        %1782 = vmatmul.mubr.f32.gmra.mrb[0].mxu0 %v1503
        %v1783 = vpop.f32.mrb[0].mxu0
        %v1784 = vadd.f32 %v1640, %v1783
        %v1785 = vpop.f32.mrb[0].mxu0
        %1786 = vmatprep.mubr.f32.mxu0 %v1508
        %1787 = vmatmul.mubr.f32.gmra.mrb[0].mxu0 %v1507
        %v1788 = vpop.f32.mrb[0].mxu0
        %v1789 = vadd.f32 %v1640, %v1788
        %v1790 = vpop.f32.mrb[0].mxu0
        %1791 = vmatprep.mubr.f32.mxu0 %v1512
        %1792 = vmatmul.mubr.f32.gmra.mrb[0].mxu0 %v1511
        %v1793 = vpop.f32.mrb[0].mxu0
        %v1794 = vadd.f32 %v1640, %v1793
        %v1795 = vpop.f32.mrb[0].mxu0
        %1796 = vmatprep.mubr.f32.mxu0 %v1516
        %1797 = vmatmul.mubr.f32.gmra.mrb[0].mxu0 %v1515
        %v1798 = vpop.f32.mrb[0].mxu0
        %v1799 = vadd.f32 %v1640, %v1798
        %v1800 = vpop.f32.mrb[0].mxu0
        %1801 = vmatprep.mubr.f32.mxu0 %v1520
        %1802 = vmatmul.mubr.f32.gmra.mrb[0].mxu0 %v1519
        %v1803 = vpop.f32.mrb[0].mxu0
        %v1804 = vadd.f32 %v1640, %v1803
        %v1805 = vpop.f32.mrb[0].mxu0
        %1806 = vmatprep.mubr.f32.mxu0 %v1524
        %1807 = vmatmul.mubr.f32.gmra.mrb[0].mxu0 %v1523
        %v1808 = vpop.f32.mrb[0].mxu0
        %v1809 = vadd.f32 %v1640, %v1808
        %v1810 = vpop.f32.mrb[0].mxu0
        %1811 = vmatprep.mubr.f32.mxu0 %v1528
        %1812 = vmatmul.mubr.f32.gmra.mrb[0].mxu0 %v1527
        %v1813 = vpop.f32.mrb[0].mxu0
        %v1814 = vadd.f32 %v1640, %v1813
        %v1815 = vpop.f32.mrb[0].mxu0
        %1816 = vmatprep.mubr.f32.mxu0 %v1532
        %1817 = vmatmul.mubr.f32.gmra.mrb[0].mxu0 %v1531
        %v1818 = vpop.f32.mrb[0].mxu0
        %v1819 = vadd.f32 %v1640, %v1818
        %v1820 = vpop.f32.mrb[0].mxu0
        %1821 = vmatprep.mubr.f32.mxu0 %v1536
        %1822 = vmatmul.mubr.f32.gmra.mrb[0].mxu0 %v1535
        %v1823 = vpop.f32.mrb[0].mxu0
        %v1824 = vadd.f32 %v1640, %v1823
        %v1825 = vpop.f32.mrb[0].mxu0
        %1826 = vmatprep.mubr.f32.mxu0 %v1540
        %1827 = vmatmul.mubr.f32.gmra.mrb[0].mxu0 %v1539
        %v1828 = vpop.f32.mrb[0].mxu0
        %v1829 = vadd.f32 %v1640, %v1828
        %v1830 = vpop.f32.mrb[0].mxu0
        %1831 = vmatprep.mubr.f32.mxu0 %v1544
        %1832 = vmatmul.mubr.f32.gmra.mrb[0].mxu0 %v1543
        %v1833 = vpop.f32.mrb[0].mxu0
        %v1834 = vadd.f32 %v1640, %v1833
        %v1835 = vpop.f32.mrb[0].mxu0
        %1836 = vmatprep.mubr.f32.mxu0 %v1548
        %1837 = vmatmul.mubr.f32.gmra.mrb[0].mxu0 %v1547
        %v1838 = vpop.f32.mrb[0].mxu0
        %v1839 = vadd.f32 %v1640, %v1838
        %v1840 = vpop.f32.mrb[0].mxu0
        %1841 = vmatprep.mubr.f32.mxu0 %v1552
        %1842 = vmatmul.mubr.f32.gmra.mrb[0].mxu0 %v1551
        %v1843 = vpop.f32.mrb[0].mxu0
        %v1844 = vadd.f32 %v1640, %v1843
        %v1845 = vpop.f32.mrb[0].mxu0
        %1846 = vmatprep.mubr.f32.mxu0 %v1556
        %1847 = vmatmul.mubr.f32.gmra.mrb[0].mxu0 %v1555
        %v1848 = vpop.f32.mrb[0].mxu0
        %v1849 = vadd.f32 %v1640, %v1848
        %v1850 = vpop.f32.mrb[0].mxu0
        %1851 = vmatprep.mubr.f32.mxu0 %v1560
        %1852 = vmatmul.mubr.f32.gmra.mrb[0].mxu0 %v1559
        %v1853 = vpop.f32.mrb[0].mxu0
        %v1854 = vadd.f32 %v1640, %v1853
        %v1855 = vpop.f32.mrb[0].mxu0
        %1856 = vmatprep.mubr.f32.mxu0 %v1564
        %1857 = vmatmul.mubr.f32.gmra.mrb[0].mxu0 %v1563
        %v1858 = vpop.f32.mrb[0].mxu0
        %v1859 = vadd.f32 %v1640, %v1858
        %v1860 = vpop.f32.mrb[0].mxu0
        %1861 = vmatprep.mubr.f32.mxu0 %v1568
        %1862 = vmatmul.mubr.f32.gmra.mrb[0].mxu0 %v1567
        %v1863 = vpop.f32.mrb[0].mxu0
        %v1864 = vadd.f32 %v1640, %v1863
        %v1865 = vpop.f32.mrb[0].mxu0
        %1866 = vdwg.mxu0
        %1867 = vmatprep.subr.mxu0 0.0
        %1868 = vmatpush1.msra.mxu0 %v1603
        %1869 = vmatprep.subr.mxu0 0.0
        %1870 = vmatpush1.msra.mxu0 %v1604
        %1871 = vmatprep.subr.mxu0 0.0
        %1872 = vmatpush1.msra.mxu0 %v1605
        %1873 = vmatprep.subr.mxu0 0.0
        %1874 = vmatpush1.msra.mxu0 %v1606
        %1875 = vmatprep.subr.mxu0 0.0
        %1876 = vmatpush1.msra.mxu0 %v1607
        %1877 = vmatprep.subr.mxu0 0.0
        %1878 = vmatpush1.msra.mxu0 %v1608
        %1879 = vmatprep.subr.mxu0 0.0
        %1880 = vmatpush1.msra.mxu0 %v1609
        %1881 = vmatprep.subr.mxu0 0.0
        %1882 = vmatpush1.msra.mxu0 %v1610
        %1883 = vmatprep.subr.mxu0 0.0
        %1884 = vmatpush1.msra.mxu0 %v1611
        %1885 = vmatprep.subr.mxu0 0.0
        %1886 = vmatpush1.msra.mxu0 %v1612
        %1887 = vmatprep.subr.mxu0 0.0
        %1888 = vmatpush1.msra.mxu0 %v1613
        %1889 = vmatprep.subr.mxu0 0.0
        %1890 = vmatpush1.msra.mxu0 %v1614
        %1891 = vmatprep.subr.mxu0 0.0
        %1892 = vmatpush1.msra.mxu0 %v1615
        %1893 = vmatprep.subr.mxu0 0.0
        %1894 = vmatpush1.msra.mxu0 %v1616
        %1895 = vmatprep.subr.mxu0 0.0
        %1896 = vmatpush1.msra.mxu0 %v1617
        %1897 = vmatprep.subr.mxu0 0.0
        %1898 = vmatpush1.msra.mxu0 %v1618
        %1899 = vmatprep.subr.mxu0 0.0
        %1900 = vmatpush1.msra.mxu0 %v1619
        %1901 = vmatprep.subr.mxu0 0.0
        %1902 = vmatpush1.msra.mxu0 %v1620
        %1903 = vmatprep.subr.mxu0 0.0
        %1904 = vmatpush1.msra.mxu0 %v1621
        %1905 = vmatprep.subr.mxu0 0.0
        %1906 = vmatpush1.msra.mxu0 %v1622
        %1907 = vmatprep.subr.mxu0 0.0
        %1908 = vmatpush1.msra.mxu0 %v1623
        %1909 = vmatprep.subr.mxu0 0.0
        %1910 = vmatpush1.msra.mxu0 %v1624
        %1911 = vmatprep.subr.mxu0 0.0
        %1912 = vmatpush1.msra.mxu0 %v1625
        %1913 = vmatprep.subr.mxu0 0.0
        %1914 = vmatpush1.msra.mxu0 %v1626
        %1915 = vmatprep.subr.mxu0 0.0
        %1916 = vmatpush1.msra.mxu0 %v1627
        %1917 = vmatprep.subr.mxu0 0.0
        %1918 = vmatpush1.msra.mxu0 %v1628
        %1919 = vmatprep.subr.mxu0 0.0
        %1920 = vmatpush1.msra.mxu0 %v1629
        %1921 = vmatprep.subr.mxu0 0.0
        %1922 = vmatpush1.msra.mxu0 %v1630
        %1923 = vmatprep.subr.mxu0 0.0
        %1924 = vmatpush1.msra.mxu0 %v1631
        %1925 = vmatprep.subr.mxu0 0.0
        %1926 = vmatpush1.msra.mxu0 %v1632
        %1927 = vmatprep.subr.mxu0 0.0
        %1928 = vmatpush1.msra.mxu0 %v1633
        %1929 = vmatprep.subr.mxu0 0.0
        %1930 = vmatpush1.msra.mxu0 %v1634
        %1931 = vmatprep.mubr.f32.mxu0 %v1446
        %1932 = vmatmul.mubr.f32.gmra.mrb[0].mxu0 %v1445
        %v1933 = vpop.f32.mrb[0].mxu0
        %v1934 = vadd.f32 %v1709, %v1933
        %v1935 = vpop.f32.mrb[0].mxu0
        %1936 = vmatprep.mubr.f32.mxu0 %v1450
        %1937 = vmatmul.mubr.f32.gmra.mrb[0].mxu0 %v1449
        %v1938 = vpop.f32.mrb[0].mxu0
        %v1939 = vadd.f32 %v1714, %v1938
        %v1940 = vpop.f32.mrb[0].mxu0
        %1941 = vmatprep.mubr.f32.mxu0 %v1454
        %1942 = vmatmul.mubr.f32.gmra.mrb[0].mxu0 %v1453
        %v1943 = vpop.f32.mrb[0].mxu0
        %v1944 = vadd.f32 %v1719, %v1943
        %v1945 = vpop.f32.mrb[0].mxu0
        %1946 = vmatprep.mubr.f32.mxu0 %v1458
        %1947 = vmatmul.mubr.f32.gmra.mrb[0].mxu0 %v1457
        %v1948 = vpop.f32.mrb[0].mxu0
        %v1949 = vadd.f32 %v1724, %v1948
        %v1950 = vpop.f32.mrb[0].mxu0
        %1951 = vmatprep.mubr.f32.mxu0 %v1462
        %1952 = vmatmul.mubr.f32.gmra.mrb[0].mxu0 %v1461
        %v1953 = vpop.f32.mrb[0].mxu0
        %v1954 = vadd.f32 %v1729, %v1953
        %v1955 = vpop.f32.mrb[0].mxu0
        %1956 = vmatprep.mubr.f32.mxu0 %v1466
        %1957 = vmatmul.mubr.f32.gmra.mrb[0].mxu0 %v1465
        %v1958 = vpop.f32.mrb[0].mxu0
        %v1959 = vadd.f32 %v1734, %v1958
        %v1960 = vpop.f32.mrb[0].mxu0
        %1961 = vmatprep.mubr.f32.mxu0 %v1470
        %1962 = vmatmul.mubr.f32.gmra.mrb[0].mxu0 %v1469
        %v1963 = vpop.f32.mrb[0].mxu0
        %v1964 = vadd.f32 %v1739, %v1963
        %v1965 = vpop.f32.mrb[0].mxu0
        %1966 = vmatprep.mubr.f32.mxu0 %v1474
        %1967 = vmatmul.mubr.f32.gmra.mrb[0].mxu0 %v1473
        %v1968 = vpop.f32.mrb[0].mxu0
        %v1969 = vadd.f32 %v1744, %v1968
        %v1970 = vpop.f32.mrb[0].mxu0
        %1971 = vmatprep.mubr.f32.mxu0 %v1478
        %1972 = vmatmul.mubr.f32.gmra.mrb[0].mxu0 %v1477
        %v1973 = vpop.f32.mrb[0].mxu0
        %v1974 = vadd.f32 %v1749, %v1973
        %v1975 = vpop.f32.mrb[0].mxu0
        %1976 = vmatprep.mubr.f32.mxu0 %v1482
        %1977 = vmatmul.mubr.f32.gmra.mrb[0].mxu0 %v1481
        %v1978 = vpop.f32.mrb[0].mxu0
        %v1979 = vadd.f32 %v1754, %v1978
        %v1980 = vpop.f32.mrb[0].mxu0
        %1981 = vmatprep.mubr.f32.mxu0 %v1486
        %1982 = vmatmul.mubr.f32.gmra.mrb[0].mxu0 %v1485
        %v1983 = vpop.f32.mrb[0].mxu0
        %v1984 = vadd.f32 %v1759, %v1983
        %v1985 = vpop.f32.mrb[0].mxu0
        %1986 = vmatprep.mubr.f32.mxu0 %v1490
        %1987 = vmatmul.mubr.f32.gmra.mrb[0].mxu0 %v1489
        %v1988 = vpop.f32.mrb[0].mxu0
        %v1989 = vadd.f32 %v1764, %v1988
        %v1990 = vpop.f32.mrb[0].mxu0
        %1991 = vmatprep.mubr.f32.mxu0 %v1494
        %1992 = vmatmul.mubr.f32.gmra.mrb[0].mxu0 %v1493
        %v1993 = vpop.f32.mrb[0].mxu0
        %v1994 = vadd.f32 %v1769, %v1993
        %v1995 = vpop.f32.mrb[0].mxu0
        %1996 = vmatprep.mubr.f32.mxu0 %v1498
        %1997 = vmatmul.mubr.f32.gmra.mrb[0].mxu0 %v1497
        %v1998 = vpop.f32.mrb[0].mxu0
        %v1999 = vadd.f32 %v1774, %v1998
        %v2000 = vpop.f32.mrb[0].mxu0
        %2001 = vmatprep.mubr.f32.mxu0 %v1502
        %2002 = vmatmul.mubr.f32.gmra.mrb[0].mxu0 %v1501
        %v2003 = vpop.f32.mrb[0].mxu0
        %v2004 = vadd.f32 %v1779, %v2003
        %v2005 = vpop.f32.mrb[0].mxu0
        %2006 = vmatprep.mubr.f32.mxu0 %v1506
        %2007 = vmatmul.mubr.f32.gmra.mrb[0].mxu0 %v1505
        %v2008 = vpop.f32.mrb[0].mxu0
        %v2009 = vadd.f32 %v1784, %v2008
        %v2010 = vpop.f32.mrb[0].mxu0
        %2011 = vmatprep.mubr.f32.mxu0 %v1510
        %2012 = vmatmul.mubr.f32.gmra.mrb[0].mxu0 %v1509
        %v2013 = vpop.f32.mrb[0].mxu0
        %v2014 = vadd.f32 %v1789, %v2013
        %v2015 = vpop.f32.mrb[0].mxu0
        %2016 = vmatprep.mubr.f32.mxu0 %v1514
        %2017 = vmatmul.mubr.f32.gmra.mrb[0].mxu0 %v1513
        %v2018 = vpop.f32.mrb[0].mxu0
        %v2019 = vadd.f32 %v1794, %v2018
        %v2020 = vpop.f32.mrb[0].mxu0
        %2021 = vmatprep.mubr.f32.mxu0 %v1518
        %2022 = vmatmul.mubr.f32.gmra.mrb[0].mxu0 %v1517
        %v2023 = vpop.f32.mrb[0].mxu0
        %v2024 = vadd.f32 %v1799, %v2023
        %v2025 = vpop.f32.mrb[0].mxu0
        %2026 = vmatprep.mubr.f32.mxu0 %v1522
        %2027 = vmatmul.mubr.f32.gmra.mrb[0].mxu0 %v1521
        %v2028 = vpop.f32.mrb[0].mxu0
        %v2029 = vadd.f32 %v1804, %v2028
        %v2030 = vpop.f32.mrb[0].mxu0
        %2031 = vmatprep.mubr.f32.mxu0 %v1526
        %2032 = vmatmul.mubr.f32.gmra.mrb[0].mxu0 %v1525
        %v2033 = vpop.f32.mrb[0].mxu0
        %v2034 = vadd.f32 %v1809, %v2033
        %v2035 = vpop.f32.mrb[0].mxu0
        %2036 = vmatprep.mubr.f32.mxu0 %v1530
        %2037 = vmatmul.mubr.f32.gmra.mrb[0].mxu0 %v1529
        %v2038 = vpop.f32.mrb[0].mxu0
        %v2039 = vadd.f32 %v1814, %v2038
        %v2040 = vpop.f32.mrb[0].mxu0
        %2041 = vmatprep.mubr.f32.mxu0 %v1534
        %2042 = vmatmul.mubr.f32.gmra.mrb[0].mxu0 %v1533
        %v2043 = vpop.f32.mrb[0].mxu0
        %v2044 = vadd.f32 %v1819, %v2043
        %v2045 = vpop.f32.mrb[0].mxu0
        %2046 = vmatprep.mubr.f32.mxu0 %v1538
        %2047 = vmatmul.mubr.f32.gmra.mrb[0].mxu0 %v1537
        %v2048 = vpop.f32.mrb[0].mxu0
        %v2049 = vadd.f32 %v1824, %v2048
        %v2050 = vpop.f32.mrb[0].mxu0
        %2051 = vmatprep.mubr.f32.mxu0 %v1542
        %2052 = vmatmul.mubr.f32.gmra.mrb[0].mxu0 %v1541
        %v2053 = vpop.f32.mrb[0].mxu0
        %v2054 = vadd.f32 %v1829, %v2053
        %v2055 = vpop.f32.mrb[0].mxu0
        %2056 = vmatprep.mubr.f32.mxu0 %v1546
        %2057 = vmatmul.mubr.f32.gmra.mrb[0].mxu0 %v1545
        %v2058 = vpop.f32.mrb[0].mxu0
        %v2059 = vadd.f32 %v1834, %v2058
        %v2060 = vpop.f32.mrb[0].mxu0
        %2061 = vmatprep.mubr.f32.mxu0 %v1550
        %2062 = vmatmul.mubr.f32.gmra.mrb[0].mxu0 %v1549
        %v2063 = vpop.f32.mrb[0].mxu0
        %v2064 = vadd.f32 %v1839, %v2063
        %v2065 = vpop.f32.mrb[0].mxu0
        %2066 = vmatprep.mubr.f32.mxu0 %v1554
        %2067 = vmatmul.mubr.f32.gmra.mrb[0].mxu0 %v1553
        %v2068 = vpop.f32.mrb[0].mxu0
        %v2069 = vadd.f32 %v1844, %v2068
        %v2070 = vpop.f32.mrb[0].mxu0
        %2071 = vmatprep.mubr.f32.mxu0 %v1558
        %2072 = vmatmul.mubr.f32.gmra.mrb[0].mxu0 %v1557
        %v2073 = vpop.f32.mrb[0].mxu0
        %v2074 = vadd.f32 %v1849, %v2073
        %v2075 = vpop.f32.mrb[0].mxu0
        %2076 = vmatprep.mubr.f32.mxu0 %v1562
        %2077 = vmatmul.mubr.f32.gmra.mrb[0].mxu0 %v1561
        %v2078 = vpop.f32.mrb[0].mxu0
        %v2079 = vadd.f32 %v1854, %v2078
        %v2080 = vpop.f32.mrb[0].mxu0
        %2081 = vmatprep.mubr.f32.mxu0 %v1566
        %2082 = vmatmul.mubr.f32.gmra.mrb[0].mxu0 %v1565
        %v2083 = vpop.f32.mrb[0].mxu0
        %v2084 = vadd.f32 %v1859, %v2083
        %v2085 = vpop.f32.mrb[0].mxu0
        %2086 = vmatprep.mubr.f32.mxu0 %v1570
        %2087 = vmatmul.mubr.f32.gmra.mrb[0].mxu0 %v1569
        %v2088 = vpop.f32.mrb[0].mxu0
        %v2089 = vadd.f32 %v1864, %v2088
        %v2090 = vpop.f32.mrb[0].mxu0
        %2091 = vdwg.mxu0
        %2092 = vst [vmem:[%s296] sm:$0xff] %v1934
        %2093 = vst [vmem:[%s296 + $0x8] sm:$0xff] %v1939
        %2094 = vst [vmem:[%s296 + $0x10] sm:$0xff] %v1944
        %2095 = vst [vmem:[%s296 + $0x18] sm:$0xff] %v1949
        %2096 = vst [vmem:[%s296 + $0x20] sm:$0xff] %v1954
        %2097 = vst [vmem:[%s296 + $0x28] sm:$0xff] %v1959
        %2098 = vst [vmem:[%s296 + $0x30] sm:$0xff] %v1964
        %2099 = vst [vmem:[%s296 + $0x38] sm:$0xff] %v1969
        %2100 = vst [vmem:[%s296 + $0x40] sm:$0xff] %v1974
        %2101 = vst [vmem:[%s296 + $0x48] sm:$0xff] %v1979
        %2102 = vst [vmem:[%s296 + $0x50] sm:$0xff] %v1984
        %2103 = vst [vmem:[%s296 + $0x58] sm:$0xff] %v1989
        %2104 = vst [vmem:[%s296 + $0x60] sm:$0xff] %v1994
        %2105 = vst [vmem:[%s296 + $0x68] sm:$0xff] %v1999
        %2106 = vst [vmem:[%s296 + $0x70] sm:$0xff] %v2004
        %2107 = vst [vmem:[%s296 + $0x78] sm:$0xff] %v2009
        %2108 = vst [vmem:[%s296 + $0x80] sm:$0xff] %v2014
        %2109 = vst [vmem:[%s296 + $0x88] sm:$0xff] %v2019
        %2110 = vst [vmem:[%s296 + $0x90] sm:$0xff] %v2024
        %2111 = vst [vmem:[%s296 + $0x98] sm:$0xff] %v2029
        %2112 = vst [vmem:[%s296 + $0xa0] sm:$0xff] %v2034
        %2113 = vst [vmem:[%s296 + $0xa8] sm:$0xff] %v2039
        %2114 = vst [vmem:[%s296 + $0xb0] sm:$0xff] %v2044
        %2115 = vst [vmem:[%s296 + $0xb8] sm:$0xff] %v2049
        %2116 = vst [vmem:[%s296 + $0xc0] sm:$0xff] %v2054
        %2117 = vst [vmem:[%s296 + $0xc8] sm:$0xff] %v2059
        %2118 = vst [vmem:[%s296 + $0xd0] sm:$0xff] %v2064
        %2119 = vst [vmem:[%s296 + $0xd8] sm:$0xff] %v2069
        %2120 = vst [vmem:[%s296 + $0xe0] sm:$0xff] %v2074
        %2121 = vst [vmem:[%s296 + $0xe8] sm:$0xff] %v2079
        %2122 = vst [vmem:[%s296 + $0xf0] sm:$0xff] %v2084
        %2123 = vst [vmem:[%s296 + $0xf8] sm:$0xff] %v2089
        %s2124 = sand.u32 %s142, 1
        %s2125 = scalar_lea.sflag [#allocation4], %s2124
        %s2126 = sand.u32 %s142, 1
        %s2127 = smul.addr %s2126, 256
        %s2128 = scalar_lea.vmem [#allocation11], %s2127
        // Predicated region
        $region61: #{feed_forward.1} parent=39 // pred_check
          %p2129 = pneg %p152
        $region62: #{feed_forward.1} parent=39 // pred_check_branch
          %2131 = sbr.rel (%p2129) target = $region64
        $region63: #{feed_forward.1} parent=39 // pred_region
          %s2132 = smul.u32 32, %s24
          %s2134 = ssub.s32 4096, 4096
          %2135 = vsyncadd %s2125, %s2134
          %s2136 = smul.addr %s2132, 128
          %s2137 = scalar_lea.hbm %s5, %s2136
          %s2138 = sshll.u32 %s2128, 4
          %s2139 = int_to_ptr.vmem [resolvable:$true] %s2138
          %2144 = dma.vmem_to_hbm [thread:$0]  %s2139, 4096, %s2137, %s2125, 128, 128, 8
        $region64: #{feed_forward.1} parent=39 // pred_fallthru
          _
      $region40: #{feed_forward.1} parent=5 // pred_fallthru
        _
      %p2145 = scmp.le.s32.totalorder 2, %s19
      // Predicated region
      $region65: #{feed_forward.1} parent=5 // pred_check
        %p2146 = pneg %p2145
      $region66: #{feed_forward.1} parent=5 // pred_check_branch
        %2148 = sbr.rel (%p2146) target = $region68
      $region67: #{feed_forward.1} parent=5 // pred_region
        %s2149 = ssub.s32 %s19, 2
        // Predicated region
        $region69: #{feed_forward.1} parent=67 // pred_check
          %p2150 = pneg %p158
        $region70: #{feed_forward.1} parent=67 // pred_check_branch
          %2152 = sbr.rel (%p2150) target = $region72
        $region71: #{feed_forward.1} parent=67 // pred_region
          %s2153 = sand.u32 %s143, 1
          %s2154 = scalar_lea.sflag [#allocation4], %s2153
          %s2155 = sand.u32 %s143, 1
          %s2156 = smul.addr %s2155, 256
          %s2157 = scalar_lea.vmem [#allocation11], %s2156
          %2158 = dma.done %s2154, 4096
        $region72: #{feed_forward.1} parent=67 // pred_fallthru
          _
      $region68: #{feed_forward.1} parent=5 // pred_fallthru
        _
    $region6: #{feed_forward.1} parent=1 // loop_footer
      %s23 = sadd.s32 1, %s19
    $region7: #{feed_forward.1} parent=1 // loop_footer_branch
      %18 = sbr.rel target = $region3
    $region8: #{feed_forward.1} parent=1 // loop_exit
      _
    %2159 = vsyncpa [#allocation3], 1
    %s2160 = scalar_lea.sflag [#allocation3], 1
    %2161 = vsyncpa %s2160, 1
    %2162 = vsyncpa [#allocation6], 1
    %2163 = vsyncpa [#allocation9], 1
    %2164 = vsyncpa [#allocation4], 1
    %s2165 = scalar_lea.sflag [#allocation4], 1
    %2166 = vsyncpa %s2165, 1

</llo_original>
